<compile_context>
chip_gen: v5e
topology: v5e:2x2
jax: 0.10.0
libtpu: 0.0.40
codegen_flags: <defaults>
</compile_context>

<pallas_src>
import jax
import jax.numpy as jnp
from jax.experimental import pallas as pl
from jax.experimental.pallas import tpu as pltpu


def _round_up(n, m):
    return ((n + m - 1) // m) * m


def reasoning_layer_kernel(x_ref,
                           g1_ref, be1_ref,      # layer_norm1 gamma/beta   (1, H)  f32
                           g2_ref, be2_ref,      # layer_norm2 gamma/beta   (1, H)  f32
                           w1_ref, b1_ref,       # Linear(H, 2H): (H, 2H) bf16, (1, 2H) f32
                           wc_ref, bc_ref,       # fused [w2 | w2@wg]: (2H, 2H) bf16, (1, 2H) f32
                           o_ref):
    eps = 1e-5
    H = o_ref.shape[-1]
    x = x_ref[...].astype(jnp.float32)

    # Small (1, H)/(1, 2H)-shaped parameters, loaded once up front.
    g1 = g1_ref[...]
    be1 = be1_ref[...]
    g2 = g2_ref[...]
    be2 = be2_ref[...]
    b1 = b1_ref[...]
    bc = bc_ref[...]

    def layer_norm(v, gamma, beta):
        # One-pass statistics: mean and E[v^2] reductions are independent, so
        # they can overlap on the XLU units instead of serializing through the
        # centered tensor.
        mu = jnp.mean(v, axis=-1, keepdims=True)
        ex2 = jnp.mean(v * v, axis=-1, keepdims=True)
        var = ex2 - mu * mu
        return (v - mu) * jax.lax.rsqrt(var + eps) * gamma + beta

    # residual = x ; x = LN1(x) ; x = x + residual
    h = layer_norm(x, g1, be1) + x
    # residual = h ; x = LN2(h)
    h2 = layer_norm(h, g2, be2)

    # feed_forward stage 1: Linear(H, 2H) -> ReLU  (Dropout = identity in eval).
    # bf16 MXU operands, f32 accumulation.
    ff1 = jnp.dot(h2.astype(jnp.bfloat16), w1_ref[...],
                  preferred_element_type=jnp.float32) + b1
    ff1 = jnp.maximum(ff1, 0.0)

    # Second FFN matmul and gate matmul fused into one (2H -> 2H) dot:
    #   columns [:H] = ff1 @ w2 + b2                    (feed-forward output)
    #   columns [H:] = ff1 @ (w2 @ wg) + (b2 @ wg + bg) (gate logits)
    comb = jnp.dot(ff1.astype(jnp.bfloat16), wc_ref[...],
                   preferred_element_type=jnp.float32) + bc
    ff = comb[:, :H]
    gate = jax.nn.sigmoid(comb[:, H:])

    # x = gate * ff + (1 - gate) * residual  ==  residual + gate * (ff - residual)
    o_ref[...] = (h + gate * (ff - h)).astype(o_ref.dtype)


def prepare_kernel_params(params):
    """One-time parameter prep: fuse w2/wg for the combined matmul and cast MXU
    weights to bf16 so no per-call HBM cast pass is needed."""
    w2, wg = params["w2"], params["wg"]
    b2, bg = params["b2"], params["bg"]
    wc = jnp.concatenate([w2, w2 @ wg], axis=1)        # (2H, 2H) f32
    bc = jnp.concatenate([b2, b2 @ wg + bg], axis=1)   # (1, 2H)  f32
    return (
        params["g1"], params["be1"],
        params["g2"], params["be2"],
        params["w1"].astype(jnp.bfloat16), params["b1"],
        wc.astype(jnp.bfloat16), bc,
    )


def reasoning_layer(x, kernel_params, *, tile_rows=256):
    """x: (batch, seq, hidden) float32. kernel_params: tuple from prepare_kernel_params."""
    B, S, H = x.shape
    N = B * S
    x2d = x.reshape(N, H)

    # Row tile: large (amortize ~0.35us per-grid-step overhead), a multiple of 8
    # sublanes, but capped so the grid has >= 4 steps whenever N allows it
    # (>= 2 steps per TensorCore on v7x megacore keeps DMA/compute overlapped).
    # TODO(synk): on v5e consider tile_rows=128 to cut vreg pressure (128-wide MXU).
    tm = min(_round_up(tile_rows, 8), _round_up(N, 8))
    tm = min(tm, max(8, _round_up(pl.cdiv(N, 4), 8)))
    n_pad = _round_up(N, tm)
    if n_pad != N:
        x2d = jnp.pad(x2d, ((0, n_pad - N), (0, 0)))
    grid = (n_pad // tm,)

    row_spec = pl.BlockSpec((tm, H), lambda i: (i, 0))

    def const_spec(arr):
        # Grid-invariant weight / bias block: constant index map (fetched once)
        # and single-buffered -> no pointless 2x VMEM copy of the weights.
        return pl.BlockSpec(arr.shape, lambda i: (0,) * arr.ndim,
                            pipeline_mode=pl.Buffered(1))

    # VMEM budget from actual sizes: in/out row tiles (double-buffered),
    # single-buffered resident weights, f32 intermediate headroom; clamped to
    # ~3/4 of this generation's VMEM capacity (48 MiB v7x, 96 MiB v5e/v6e).
    w_bytes = sum(int(a.size) * a.dtype.itemsize for a in kernel_params)
    est = (2 * 2 * tm * H * 4          # x / out tiles, double-buffered, f32
           + w_bytes                   # resident weights, single-buffered
           + 6 * tm * 2 * H * 4)       # (tm, 2H) f32 intermediates headroom
    try:
        vmem_cap = int(pltpu.get_tpu_info().vmem_capacity_bytes)
    except Exception:
        vmem_cap = 64 * 1024 * 1024    # conservative fallback: v7x per-core VMEM
    vmem_limit = int(min(max(est, 32 * 1024 * 1024), (vmem_cap * 3) // 4))

    out = pl.pallas_call(
        reasoning_layer_kernel,
        out_shape=jax.ShapeDtypeStruct((n_pad, H), x.dtype),
        grid_spec=pltpu.PrefetchScalarGridSpec(
            num_scalar_prefetch=0,
            grid=grid,
            in_specs=[row_spec] + [const_spec(w) for w in kernel_params],
            out_specs=row_spec,
        ),
        compiler_params=pltpu.CompilerParams(
            dimension_semantics=("parallel",),
            vmem_limit_bytes=vmem_limit,
        ),
    )(x2d, *kernel_params)

    return out[:N].reshape(B, S, H)


def init_params(key, hidden):
    """Deterministic synthetic parameters matching ReasoningLayer(__init__)."""
    ks = jax.random.split(key, 8)
    scale = 0.05
    return {
        # LayerNorm affine params (stored as (1, H) for lane broadcasting)
        "g1": jnp.ones((1, hidden), jnp.float32)
              + 0.1 * jax.random.normal(ks[0], (1, hidden), jnp.float32),
        "be1": 0.1 * jax.random.normal(ks[1], (1, hidden), jnp.float32),
        "g2": jnp.ones((1, hidden), jnp.float32)
              + 0.1 * jax.random.normal(ks[2], (1, hidden), jnp.float32),
        "be2": 0.1 * jax.random.normal(ks[3], (1, hidden), jnp.float32),
        # feed_forward: Linear(H, 2H), Linear(2H, H)  -- stored as (in, out)
        "w1": scale * jax.random.normal(ks[4], (hidden, 2 * hidden), jnp.float32),
        "b1": scale * jax.random.normal(ks[5], (1, 2 * hidden), jnp.float32),
        "w2": scale * jax.random.normal(ks[6], (2 * hidden, hidden), jnp.float32),
        "b2": scale * jax.random.normal(ks[7], (1, hidden), jnp.float32),
        # reasoning_gate: Linear(H, H)
        "wg": scale * jax.random.normal(jax.random.fold_in(key, 100),
                                        (hidden, hidden), jnp.float32),
        "bg": scale * jax.random.normal(jax.random.fold_in(key, 101),
                                        (1, hidden), jnp.float32),
    }


def _ln_twopass(v, g, b, eps=1e-5):
    mu = jnp.mean(v, axis=-1, keepdims=True)
    c = v - mu
    var = jnp.mean(c * c, axis=-1, keepdims=True)
    return c * jax.lax.rsqrt(var + eps) * g + b


def _ln_onepass(v, g, b, eps=1e-5):
    mu = jnp.mean(v, axis=-1, keepdims=True)
    ex2 = jnp.mean(v * v, axis=-1, keepdims=True)
    var = ex2 - mu * mu
    return (v - mu) * jax.lax.rsqrt(var + eps) * g + b


def reasoning_layer_ref(x, p):
    """Pure-f32 reference matching the PyTorch forward (eval mode)."""
    residual = x
    h = _ln_twopass(x, p["g1"], p["be1"]) + residual
    residual = h
    h2 = _ln_twopass(h, p["g2"], p["be2"])
    ff = jnp.maximum(jnp.dot(h2, p["w1"]) + p["b1"], 0.0)
    ff = jnp.dot(ff, p["w2"]) + p["b2"]
    gate = jax.nn.sigmoid(jnp.dot(ff, p["wg"]) + p["bg"])
    return gate * ff + (1.0 - gate) * residual


def reasoning_layer_ref_kernel_policy(x, p):
    """Reference mirroring the kernel's exact precision policy: bf16 MXU
    operands, f32 accumulation, one-pass LN, fused w2/wg matmul."""
    H = x.shape[-1]
    wc = jnp.concatenate([p["w2"], p["w2"] @ p["wg"]], axis=1).astype(jnp.bfloat16)
    bc = jnp.concatenate([p["b2"], p["b2"] @ p["wg"] + p["bg"]], axis=1)
    h = _ln_onepass(x, p["g1"], p["be1"]) + x
    h2 = _ln_onepass(h, p["g2"], p["be2"])
    ff1 = jnp.maximum(
        jnp.dot(h2.astype(jnp.bfloat16), p["w1"].astype(jnp.bfloat16),
                preferred_element_type=jnp.float32) + p["b1"], 0.0)
    comb = jnp.dot(ff1.astype(jnp.bfloat16), wc,
                   preferred_element_type=jnp.float32) + bc
    ff = comb[..., :H]
    gate = jax.nn.sigmoid(comb[..., H:])
    return h + gate * (ff - h)


if __name__ == "__main__":
    key = jax.random.PRNGKey(0)
    H = 128  # lane-aligned hidden size
    kp, kx1, kx2 = jax.random.split(key, 3)
    params = init_params(kp, H)
    # One-time parameter prep (bf16 cast + w2/wg fusion), reused across calls.
    kparams = prepare_kernel_params(params)

    # Case 1: 512 rows -> row tile capped to 128 -> 4 grid steps
    # (>= 2 per TensorCore on v7x, keeps the pipeline busy on v5e/v6e too).
    x1 = jax.random.normal(kx1, (4, 128, H), jnp.float32)
    out1 = jax.block_until_ready(reasoning_layer(x1, kparams))

    # Case 2: ragged row count (18 rows) -> exercises padding / remainder path.
    x2 = jax.random.normal(kx2, (2, 9, H), jnp.float32)
    out2 = jax.block_until_ready(reasoning_layer(x2, kparams))

    for x, out in ((x1, out1), (x2, out2)):
        assert out.shape == x.shape
        # Tight check against a reference using the kernel's exact precision
        # policy (bf16 operands / f32 accumulation / fused gate matmul).
        ref_k = reasoning_layer_ref_kernel_policy(x, params)
        assert jnp.allclose(out, ref_k, atol=2e-3, rtol=2e-3), \
            "mismatch vs kernel-policy reference"
        # Loose sanity check against the pure-f32 PyTorch-equivalent math.
        ref_f32 = reasoning_layer_ref(x, params)
        assert jnp.allclose(out, ref_f32, atol=5e-2, rtol=5e-2), \
            "mismatch vs f32 reference"

    print("KERNEL_OK")
</pallas_src>

<mosaic_0001>
module attributes {stable_mosaic.version = 11 : i64} {
  func.func @reasoning_layer_kernel(%arg0: i32, %arg1: memref<128x128xf32, #tpu.memory_space<vmem>>, %arg2: memref<1x128xf32, #tpu.memory_space<vmem>>, %arg3: memref<1x128xf32, #tpu.memory_space<vmem>>, %arg4: memref<1x128xf32, #tpu.memory_space<vmem>>, %arg5: memref<1x128xf32, #tpu.memory_space<vmem>>, %arg6: memref<128x256xbf16, #tpu.memory_space<vmem>>, %arg7: memref<1x256xf32, #tpu.memory_space<vmem>>, %arg8: memref<256x256xbf16, #tpu.memory_space<vmem>>, %arg9: memref<1x256xf32, #tpu.memory_space<vmem>>, %arg10: memref<128x128xf32, #tpu.memory_space<vmem>>) attributes {dimension_semantics = [#tpu.dimension_semantics<parallel>], iteration_bounds = array<i64: 4>, scalar_prefetch = 0 : i64, scratch_operands = 0 : i64, tpu.core_type = #tpu.core_type<tc>, window_params = [{transform_indices = @transform_0, window_bounds = array<i64: 128, 128>}, {pipeline_mode = #tpu.pipeline_mode<synchronous>, transform_indices = @transform_1, window_bounds = array<i64: 1, 128>}, {pipeline_mode = #tpu.pipeline_mode<synchronous>, transform_indices = @transform_2, window_bounds = array<i64: 1, 128>}, {pipeline_mode = #tpu.pipeline_mode<synchronous>, transform_indices = @transform_3, window_bounds = array<i64: 1, 128>}, {pipeline_mode = #tpu.pipeline_mode<synchronous>, transform_indices = @transform_4, window_bounds = array<i64: 1, 128>}, {pipeline_mode = #tpu.pipeline_mode<synchronous>, transform_indices = @transform_5, window_bounds = array<i64: 128, 256>}, {pipeline_mode = #tpu.pipeline_mode<synchronous>, transform_indices = @transform_6, window_bounds = array<i64: 1, 256>}, {pipeline_mode = #tpu.pipeline_mode<synchronous>, transform_indices = @transform_7, window_bounds = array<i64: 256, 256>}, {pipeline_mode = #tpu.pipeline_mode<synchronous>, transform_indices = @transform_8, window_bounds = array<i64: 1, 256>}, {transform_indices = @transform_9, window_bounds = array<i64: 128, 128>}]} {
    %c0 = arith.constant 0 : index
    %c0_0 = arith.constant 0 : index
    %0 = vector.load %arg1[%c0, %c0_0] : memref<128x128xf32, #tpu.memory_space<vmem>>, vector<128x128xf32>
    %c0_1 = arith.constant 0 : index
    %c0_2 = arith.constant 0 : index
    %1 = vector.load %arg2[%c0_1, %c0_2] : memref<1x128xf32, #tpu.memory_space<vmem>>, vector<1x128xf32>
    %c0_3 = arith.constant 0 : index
    %c0_4 = arith.constant 0 : index
    %2 = vector.load %arg3[%c0_3, %c0_4] : memref<1x128xf32, #tpu.memory_space<vmem>>, vector<1x128xf32>
    %c0_5 = arith.constant 0 : index
    %c0_6 = arith.constant 0 : index
    %3 = vector.load %arg4[%c0_5, %c0_6] : memref<1x128xf32, #tpu.memory_space<vmem>>, vector<1x128xf32>
    %c0_7 = arith.constant 0 : index
    %c0_8 = arith.constant 0 : index
    %4 = vector.load %arg5[%c0_7, %c0_8] : memref<1x128xf32, #tpu.memory_space<vmem>>, vector<1x128xf32>
    %c0_9 = arith.constant 0 : index
    %c0_10 = arith.constant 0 : index
    %5 = vector.load %arg7[%c0_9, %c0_10] : memref<1x256xf32, #tpu.memory_space<vmem>>, vector<1x256xf32>
    %c0_11 = arith.constant 0 : index
    %c0_12 = arith.constant 0 : index
    %6 = vector.load %arg9[%c0_11, %c0_12] : memref<1x256xf32, #tpu.memory_space<vmem>>, vector<1x256xf32>
    %cst = arith.constant dense<0.000000e+00> : vector<128xf32>
    %7 = vector.multi_reduction <add>, %0, %cst [1] : vector<128x128xf32> to vector<128xf32>
    %8 = vector.shape_cast %7 : vector<128xf32> to vector<128x1xf32>
    %cst_13 = arith.constant 1.280000e+02 : f32
    %9 = vector.broadcast %cst_13 : f32 to vector<128x1xf32>
    %10 = arith.divf %8, %9 : vector<128x1xf32>
    %11 = arith.mulf %0, %0 : vector<128x128xf32>
    %cst_14 = arith.constant dense<0.000000e+00> : vector<128xf32>
    %12 = vector.multi_reduction <add>, %11, %cst_14 [1] : vector<128x128xf32> to vector<128xf32>
    %13 = vector.shape_cast %12 : vector<128xf32> to vector<128x1xf32>
    %cst_15 = arith.constant 1.280000e+02 : f32
    %14 = vector.broadcast %cst_15 : f32 to vector<128x1xf32>
    %15 = arith.divf %13, %14 : vector<128x1xf32>
    %16 = arith.mulf %10, %10 : vector<128x1xf32>
    %17 = arith.subf %15, %16 : vector<128x1xf32>
    %18 = vector.broadcast %10 : vector<128x1xf32> to vector<128x128xf32>
    %19 = arith.subf %0, %18 : vector<128x128xf32>
    %cst_16 = arith.constant 9.99999974E-6 : f32
    %20 = vector.broadcast %cst_16 : f32 to vector<128x1xf32>
    %21 = arith.addf %17, %20 : vector<128x1xf32>
    %22 = math.rsqrt %21 : vector<128x1xf32>
    %23 = vector.broadcast %22 : vector<128x1xf32> to vector<128x128xf32>
    %24 = arith.mulf %19, %23 : vector<128x128xf32>
    %25 = vector.broadcast %1 : vector<1x128xf32> to vector<128x128xf32>
    %26 = arith.mulf %24, %25 : vector<128x128xf32>
    %27 = vector.broadcast %2 : vector<1x128xf32> to vector<128x128xf32>
    %28 = arith.addf %26, %27 : vector<128x128xf32>
    %29 = arith.addf %28, %0 : vector<128x128xf32>
    %cst_17 = arith.constant dense<0.000000e+00> : vector<128xf32>
    %30 = vector.multi_reduction <add>, %29, %cst_17 [1] : vector<128x128xf32> to vector<128xf32>
    %31 = vector.shape_cast %30 : vector<128xf32> to vector<128x1xf32>
    %cst_18 = arith.constant 1.280000e+02 : f32
    %32 = vector.broadcast %cst_18 : f32 to vector<128x1xf32>
    %33 = arith.divf %31, %32 : vector<128x1xf32>
    %34 = arith.mulf %29, %29 : vector<128x128xf32>
    %cst_19 = arith.constant dense<0.000000e+00> : vector<128xf32>
    %35 = vector.multi_reduction <add>, %34, %cst_19 [1] : vector<128x128xf32> to vector<128xf32>
    %36 = vector.shape_cast %35 : vector<128xf32> to vector<128x1xf32>
    %cst_20 = arith.constant 1.280000e+02 : f32
    %37 = vector.broadcast %cst_20 : f32 to vector<128x1xf32>
    %38 = arith.divf %36, %37 : vector<128x1xf32>
    %39 = arith.mulf %33, %33 : vector<128x1xf32>
    %40 = arith.subf %38, %39 : vector<128x1xf32>
    %41 = vector.broadcast %33 : vector<128x1xf32> to vector<128x128xf32>
    %42 = arith.subf %29, %41 : vector<128x128xf32>
    %cst_21 = arith.constant 9.99999974E-6 : f32
    %43 = vector.broadcast %cst_21 : f32 to vector<128x1xf32>
    %44 = arith.addf %40, %43 : vector<128x1xf32>
    %45 = math.rsqrt %44 : vector<128x1xf32>
    %46 = vector.broadcast %45 : vector<128x1xf32> to vector<128x128xf32>
    %47 = arith.mulf %42, %46 : vector<128x128xf32>
    %48 = vector.broadcast %3 : vector<1x128xf32> to vector<128x128xf32>
    %49 = arith.mulf %47, %48 : vector<128x128xf32>
    %50 = vector.broadcast %4 : vector<1x128xf32> to vector<128x128xf32>
    %51 = arith.addf %49, %50 : vector<128x128xf32>
    %52 = arith.truncf %51 : vector<128x128xf32> to vector<128x128xbf16>
    %c0_22 = arith.constant 0 : index
    %c0_23 = arith.constant 0 : index
    %53 = vector.load %arg6[%c0_22, %c0_23] : memref<128x256xbf16, #tpu.memory_space<vmem>>, vector<128x256xbf16>
    %cst_24 = arith.constant dense<0.000000e+00> : vector<128x256xf32>
    %54 = tpu.matmul %52, %53, %cst_24 {dimension_numbers = #tpu.dot_dimension_numbers<[1], [0], [0], [1], [0, 0, 1, 1], [], []>} : vector<128x128xbf16>, vector<128x256xbf16>, vector<128x256xf32> -> vector<128x256xf32>
    %55 = vector.broadcast %5 : vector<1x256xf32> to vector<128x256xf32>
    %56 = arith.addf %54, %55 : vector<128x256xf32>
    %cst_25 = arith.constant 0.000000e+00 : f32
    %57 = vector.broadcast %cst_25 : f32 to vector<128x256xf32>
    %58 = arith.maximumf %56, %57 : vector<128x256xf32>
    %59 = arith.truncf %58 : vector<128x256xf32> to vector<128x256xbf16>
    %c0_26 = arith.constant 0 : index
    %c0_27 = arith.constant 0 : index
    %60 = vector.load %arg8[%c0_26, %c0_27] : memref<256x256xbf16, #tpu.memory_space<vmem>>, vector<256x256xbf16>
    %cst_28 = arith.constant dense<0.000000e+00> : vector<128x256xf32>
    %61 = tpu.matmul %59, %60, %cst_28 {dimension_numbers = #tpu.dot_dimension_numbers<[1], [0], [0], [1], [0, 0, 1, 1], [], []>} : vector<128x256xbf16>, vector<256x256xbf16>, vector<128x256xf32> -> vector<128x256xf32>
    %62 = vector.broadcast %6 : vector<1x256xf32> to vector<128x256xf32>
    %63 = arith.addf %61, %62 : vector<128x256xf32>
    %64 = vector.extract_strided_slice %63 {offsets = [0, 0], sizes = [128, 128], strides = [1, 1]} : vector<128x256xf32> to vector<128x128xf32>
    %65 = vector.extract_strided_slice %63 {offsets = [0, 128], sizes = [128, 128], strides = [1, 1]} : vector<128x256xf32> to vector<128x128xf32>
    %66 = arith.negf %65 : vector<128x128xf32>
    %67 = math.exp %66 : vector<128x128xf32>
    %cst_29 = arith.constant 1.000000e+00 : f32
    %68 = vector.broadcast %cst_29 : f32 to vector<128x128xf32>
    %69 = arith.addf %68, %67 : vector<128x128xf32>
    %70 = arith.divf %68, %69 : vector<128x128xf32>
    %71 = arith.subf %64, %29 : vector<128x128xf32>
    %72 = arith.mulf %70, %71 : vector<128x128xf32>
    %73 = arith.addf %29, %72 : vector<128x128xf32>
    %c0_30 = arith.constant 0 : index
    %c0_31 = arith.constant 0 : index
    %74 = vector.load %arg10[%c0_30, %c0_31] : memref<128x128xf32, #tpu.memory_space<vmem>>, vector<128x128xf32>
    tpu.vector_store %arg10[%c0_30, %c0_31], %73 {strides = array<i32>} : memref<128x128xf32, #tpu.memory_space<vmem>>, vector<128x128xf32>,
    return
  }
  func.func @transform_0(%arg0: i32) -> (i32, i32) {
    %c0_i32 = arith.constant 0 : i32
    %c0_i32_0 = arith.constant 0 : i32
    return %arg0, %c0_i32 : i32, i32
  }
  func.func @transform_1(%arg0: i32) -> (i32, i32) {
    %c0_i32 = arith.constant 0 : i32
    %c0_i32_0 = arith.constant 0 : i32
    %c0_i32_1 = arith.constant 0 : i32
    return %c0_i32, %c0_i32_0 : i32, i32
  }
  func.func @transform_2(%arg0: i32) -> (i32, i32) {
    %c0_i32 = arith.constant 0 : i32
    %c0_i32_0 = arith.constant 0 : i32
    %c0_i32_1 = arith.constant 0 : i32
    return %c0_i32, %c0_i32_0 : i32, i32
  }
  func.func @transform_3(%arg0: i32) -> (i32, i32) {
    %c0_i32 = arith.constant 0 : i32
    %c0_i32_0 = arith.constant 0 : i32
    %c0_i32_1 = arith.constant 0 : i32
    return %c0_i32, %c0_i32_0 : i32, i32
  }
  func.func @transform_4(%arg0: i32) -> (i32, i32) {
    %c0_i32 = arith.constant 0 : i32
    %c0_i32_0 = arith.constant 0 : i32
    %c0_i32_1 = arith.constant 0 : i32
    return %c0_i32, %c0_i32_0 : i32, i32
  }
  func.func @transform_5(%arg0: i32) -> (i32, i32) {
    %c0_i32 = arith.constant 0 : i32
    %c0_i32_0 = arith.constant 0 : i32
    %c0_i32_1 = arith.constant 0 : i32
    return %c0_i32, %c0_i32_0 : i32, i32
  }
  func.func @transform_6(%arg0: i32) -> (i32, i32) {
    %c0_i32 = arith.constant 0 : i32
    %c0_i32_0 = arith.constant 0 : i32
    %c0_i32_1 = arith.constant 0 : i32
    return %c0_i32, %c0_i32_0 : i32, i32
  }
  func.func @transform_7(%arg0: i32) -> (i32, i32) {
    %c0_i32 = arith.constant 0 : i32
    %c0_i32_0 = arith.constant 0 : i32
    %c0_i32_1 = arith.constant 0 : i32
    return %c0_i32, %c0_i32_0 : i32, i32
  }
  func.func @transform_8(%arg0: i32) -> (i32, i32) {
    %c0_i32 = arith.constant 0 : i32
    %c0_i32_0 = arith.constant 0 : i32
    %c0_i32_1 = arith.constant 0 : i32
    return %c0_i32, %c0_i32_0 : i32, i32
  }
  func.func @transform_9(%arg0: i32) -> (i32, i32) {
    %c0_i32 = arith.constant 0 : i32
    %c0_i32_0 = arith.constant 0 : i32
    return %arg0, %c0_i32 : i32, i32
  }
}

</mosaic_0001>

<llo_original>
// kernel: tpu_custom_call.1
$region0: #{tpu_custom_call.1}
  #allocation0 [shape = 'u32[]', space=smem, size = 0x4, offset = 0x4, fixed_abs, tag = 'smem constant byte address 0x4 - core index']
  #allocation1 [shape = 'u32[72,128]{1,0:T(1,128)}', space=vmem, size = 0x9000, scoped, tag = 'internal scratch']
  %s0 = inlined_call_operand.hbm [shape: f32[512,128], index: 0, kind: input, shape index: {}]
  %s1 = inlined_call_operand.hbm [shape: f32[1,128], index: 1, kind: input, shape index: {}]
  %s2 = inlined_call_operand.hbm [shape: f32[1,128], index: 2, kind: input, shape index: {}]
  %s3 = inlined_call_operand.hbm [shape: f32[1,128], index: 3, kind: input, shape index: {}]
  %s4 = inlined_call_operand.hbm [shape: f32[1,128], index: 4, kind: input, shape index: {}]
  %s5 = inlined_call_operand.hbm [shape: bf16[128,256], index: 5, kind: input, shape index: {}]
  %s6 = inlined_call_operand.vmem [shape: f32[1,256], index: 6, kind: input, shape index: {}]
  %s7 = inlined_call_operand.hbm [shape: bf16[256,256], index: 7, kind: input, shape index: {}]
  %s8 = inlined_call_operand.vmem [shape: f32[1,256], index: 8, kind: input, shape index: {}]
  %s9 = inlined_call_operand.hbm [shape: f32[512,128], index: 9, kind: output, shape index: {}]
  %s10 = sld [smem:[#allocation0]]
  $region97: #{tpu_custom_call.1} parent=0
    _
  %s12 = ssub.s32 1, %s10
  %s13 = scalar_select 0, %s12, %s10
  $region1: #{tpu_custom_call.1} parent=0
    #allocation2 [shape = 'u8[131072]{0}', space=vmem, size = 0x20000, scoped, tag = 'input window, operand 0']
    #allocation3 [shape = 's32[2]{0}', space=sflag, size = 0x8, scoped, tag = 'scoped memory for tpu_custom_call.1']
    #allocation4 [shape = 's32[2]{0}', space=sflag, size = 0x8, scoped, tag = 'scoped memory for tpu_custom_call.1']
    #allocation5 [shape = 'u8[512]{0}', space=vmem, size = 0x400, scoped, tag = 'input window, operand 1, single buffered']
    #allocation6 [shape = 's32[1]{0}', space=sflag, size = 0x4, scoped, tag = 'scoped memory for tpu_custom_call.1']
    #allocation7 [shape = 'u8[512]{0}', space=vmem, size = 0x400, scoped, tag = 'input window, operand 2, single buffered']
    #allocation8 [shape = 'u8[512]{0}', space=vmem, size = 0x400, scoped, tag = 'input window, operand 3, single buffered']
    #allocation9 [shape = 's32[1]{0}', space=sflag, size = 0x4, scoped, tag = 'scoped memory for tpu_custom_call.1']
    #allocation10 [shape = 'u8[512]{0}', space=vmem, size = 0x400, scoped, tag = 'input window, operand 4, single buffered']
    #allocation11 [shape = 'u8[65536]{0}', space=vmem, size = 0x10000, scoped, tag = 'input window, operand 5, single buffered']
    #allocation12 [shape = 's32[1]{0}', space=sflag, size = 0x4, scoped, tag = 'scoped memory for tpu_custom_call.1']
    #allocation13 [shape = 'u8[131072]{0}', space=vmem, size = 0x20000, scoped, tag = 'input window, operand 7, single buffered']
    #allocation14 [shape = 'u8[131072]{0}', space=vmem, size = 0x20000, scoped, tag = 'output window, operand 0']
    %14 = vsyncpa [#allocation3], 0
    %s15 = scalar_lea.sflag [#allocation3], 1
    %16 = vsyncpa %s15, 0
    %17 = vsyncpa [#allocation6], 0
    %18 = vsyncpa [#allocation9], 0
    %19 = vsyncpa [#allocation12], 0
    %20 = vsyncpa [#allocation4], 0
    %s21 = scalar_lea.sflag [#allocation4], 1
    %22 = vsyncpa %s21, 0
    loop: start=0, step=1, limit=6
    $region2: #{tpu_custom_call.1} parent=1 // loop_pre_header
      _
    $region3: #{tpu_custom_call.1} parent=1 // loop_header
      %s24 = sphi 0, %s28
      %p25 = scmp.ge.s32.totalorder %s24, 6
      %s34 = sphi 0, %s36
      %s37 = sphi 0, %s34
      %s38 = sphi 0, %s37
      %s54 = sphi 0, %s38
      %s58 = sphi 0, %s58
      %s60 = sphi 0, %s58
      %s61 = sphi 0, %s60
      %s75 = sphi 0, %s61
      %s79 = sphi 0, %s79
      %s81 = sphi 0, %s79
      %s82 = sphi 0, %s81
      %s96 = sphi 0, %s82
      %s100 = sphi 0, %s100
      %s102 = sphi 0, %s100
      %s103 = sphi 0, %s102
      %s117 = sphi 0, %s103
      %s121 = sphi 0, %s121
      %s123 = sphi 0, %s121
      %s124 = sphi 0, %s123
      %s138 = sphi 0, %s124
      %s142 = sphi 0, %s142
      %s144 = sphi 0, %s142
      %s145 = sphi 0, %s144
      %s159 = sphi 0, %s145
      %s163 = sphi 0, %s163
      %s165 = sphi 0, %s163
      %s166 = sphi 0, %s165
      %s180 = sphi 0, %s166
      %s184 = sphi 0, %s184
      %s186 = sphi 0, %s184
      %s187 = sphi 0, %s186
      %s201 = sphi 0, %s187
      %s205 = sphi 0, %s205
      %s207 = sphi 0, %s205
      %s208 = sphi 0, %s207
      %s222 = sphi 0, %s208
      %s228 = sphi 0, %s230
      %s231 = sphi 0, %s228
      %s232 = sphi 0, %s231
      %s248 = sphi 0, %s232
    $region4: #{tpu_custom_call.1} parent=1 // loop_header_branch
      %27 = sbr.rel (%p25) target = $region8
    $region5: #{tpu_custom_call.1} parent=1 // loop_body
      %s29 = ssub.s32 %s24, 1
      %s30 = ssub.s32 %s24, 2
      %s31 = sadd.s32 %s24, 1
      %s32 = ssub.s32 %s24, %s31
      %p33 = scmp.eq.s32.totalorder %s32, 0
      %s35 = sadd.s32 %s34, 1
      %s36 = scalar_select %p33, %s34, %s35
      %p39 = pneg %p33
      %p40 = scmp.eq.s32.totalorder %s24, 3
      %p41 = por %p39, %p40
      %p42 = scmp.ne.s32.totalorder %s34, %s37
      %p43 = scmp.eq.s32.totalorder %s24, 0
      %p44 = por %p42, %p43
      %p45 = scmp.ne.s32.totalorder %s34, %s37
      %p46 = scmp.eq.s32.totalorder %s29, 3
      %p47 = por %p45, %p46
      %p48 = scmp.ne.s32.totalorder %s37, %s38
      %p49 = scmp.eq.s32.totalorder %s29, 0
      %p50 = por %p48, %p49
      %p51 = scmp.ne.s32.totalorder %s37, %s38
      %p52 = scmp.eq.s32.totalorder %s30, 3
      %p53 = por %p51, %p52
      %p55 = scmp.ne.s32.totalorder %s38, %s54
      %p56 = scmp.eq.s32.totalorder %s30, 0
      %p57 = por %p55, %p56
      %s59 = sadd.s32 %s58, 1
      %p62 = scmp.eq.s32.totalorder %s24, 3
      %p63 = scmp.ne.s32.totalorder %s58, %s60
      %p64 = scmp.eq.s32.totalorder %s24, 0
      %p65 = por %p63, %p64
      %p66 = scmp.ne.s32.totalorder %s58, %s60
      %p67 = scmp.eq.s32.totalorder %s29, 3
      %p68 = por %p66, %p67
      %p69 = scmp.ne.s32.totalorder %s60, %s61
      %p70 = scmp.eq.s32.totalorder %s29, 0
      %p71 = por %p69, %p70
      %p72 = scmp.ne.s32.totalorder %s60, %s61
      %p73 = scmp.eq.s32.totalorder %s30, 3
      %p74 = por %p72, %p73
      %p76 = scmp.ne.s32.totalorder %s61, %s75
      %p77 = scmp.eq.s32.totalorder %s30, 0
      %p78 = por %p76, %p77
      %s80 = sadd.s32 %s79, 1
      %p83 = scmp.eq.s32.totalorder %s24, 3
      %p84 = scmp.ne.s32.totalorder %s79, %s81
      %p85 = scmp.eq.s32.totalorder %s24, 0
      %p86 = por %p84, %p85
      %p87 = scmp.ne.s32.totalorder %s79, %s81
      %p88 = scmp.eq.s32.totalorder %s29, 3
      %p89 = por %p87, %p88
      %p90 = scmp.ne.s32.totalorder %s81, %s82
      %p91 = scmp.eq.s32.totalorder %s29, 0
      %p92 = por %p90, %p91
      %p93 = scmp.ne.s32.totalorder %s81, %s82
      %p94 = scmp.eq.s32.totalorder %s30, 3
      %p95 = por %p93, %p94
      %p97 = scmp.ne.s32.totalorder %s82, %s96
      %p98 = scmp.eq.s32.totalorder %s30, 0
      %p99 = por %p97, %p98
      %s101 = sadd.s32 %s100, 1
      %p104 = scmp.eq.s32.totalorder %s24, 3
      %p105 = scmp.ne.s32.totalorder %s100, %s102
      %p106 = scmp.eq.s32.totalorder %s24, 0
      %p107 = por %p105, %p106
      %p108 = scmp.ne.s32.totalorder %s100, %s102
      %p109 = scmp.eq.s32.totalorder %s29, 3
      %p110 = por %p108, %p109
      %p111 = scmp.ne.s32.totalorder %s102, %s103
      %p112 = scmp.eq.s32.totalorder %s29, 0
      %p113 = por %p111, %p112
      %p114 = scmp.ne.s32.totalorder %s102, %s103
      %p115 = scmp.eq.s32.totalorder %s30, 3
      %p116 = por %p114, %p115
      %p118 = scmp.ne.s32.totalorder %s103, %s117
      %p119 = scmp.eq.s32.totalorder %s30, 0
      %p120 = por %p118, %p119
      %s122 = sadd.s32 %s121, 1
      %p125 = scmp.eq.s32.totalorder %s24, 3
      %p126 = scmp.ne.s32.totalorder %s121, %s123
      %p127 = scmp.eq.s32.totalorder %s24, 0
      %p128 = por %p126, %p127
      %p129 = scmp.ne.s32.totalorder %s121, %s123
      %p130 = scmp.eq.s32.totalorder %s29, 3
      %p131 = por %p129, %p130
      %p132 = scmp.ne.s32.totalorder %s123, %s124
      %p133 = scmp.eq.s32.totalorder %s29, 0
      %p134 = por %p132, %p133
      %p135 = scmp.ne.s32.totalorder %s123, %s124
      %p136 = scmp.eq.s32.totalorder %s30, 3
      %p137 = por %p135, %p136
      %p139 = scmp.ne.s32.totalorder %s124, %s138
      %p140 = scmp.eq.s32.totalorder %s30, 0
      %p141 = por %p139, %p140
      %s143 = sadd.s32 %s142, 1
      %p146 = scmp.eq.s32.totalorder %s24, 3
      %p147 = scmp.ne.s32.totalorder %s142, %s144
      %p148 = scmp.eq.s32.totalorder %s24, 0
      %p149 = por %p147, %p148
      %p150 = scmp.ne.s32.totalorder %s142, %s144
      %p151 = scmp.eq.s32.totalorder %s29, 3
      %p152 = por %p150, %p151
      %p153 = scmp.ne.s32.totalorder %s144, %s145
      %p154 = scmp.eq.s32.totalorder %s29, 0
      %p155 = por %p153, %p154
      %p156 = scmp.ne.s32.totalorder %s144, %s145
      %p157 = scmp.eq.s32.totalorder %s30, 3
      %p158 = por %p156, %p157
      %p160 = scmp.ne.s32.totalorder %s145, %s159
      %p161 = scmp.eq.s32.totalorder %s30, 0
      %p162 = por %p160, %p161
      %s164 = sadd.s32 %s163, 1
      %p167 = scmp.eq.s32.totalorder %s24, 3
      %p168 = scmp.ne.s32.totalorder %s163, %s165
      %p169 = scmp.eq.s32.totalorder %s24, 0
      %p170 = por %p168, %p169
      %p171 = scmp.ne.s32.totalorder %s163, %s165
      %p172 = scmp.eq.s32.totalorder %s29, 3
      %p173 = por %p171, %p172
      %p174 = scmp.ne.s32.totalorder %s165, %s166
      %p175 = scmp.eq.s32.totalorder %s29, 0
      %p176 = por %p174, %p175
      %p177 = scmp.ne.s32.totalorder %s165, %s166
      %p178 = scmp.eq.s32.totalorder %s30, 3
      %p179 = por %p177, %p178
      %p181 = scmp.ne.s32.totalorder %s166, %s180
      %p182 = scmp.eq.s32.totalorder %s30, 0
      %p183 = por %p181, %p182
      %s185 = sadd.s32 %s184, 1
      %p188 = scmp.eq.s32.totalorder %s24, 3
      %p189 = scmp.ne.s32.totalorder %s184, %s186
      %p190 = scmp.eq.s32.totalorder %s24, 0
      %p191 = por %p189, %p190
      %p192 = scmp.ne.s32.totalorder %s184, %s186
      %p193 = scmp.eq.s32.totalorder %s29, 3
      %p194 = por %p192, %p193
      %p195 = scmp.ne.s32.totalorder %s186, %s187
      %p196 = scmp.eq.s32.totalorder %s29, 0
      %p197 = por %p195, %p196
      %p198 = scmp.ne.s32.totalorder %s186, %s187
      %p199 = scmp.eq.s32.totalorder %s30, 3
      %p200 = por %p198, %p199
      %p202 = scmp.ne.s32.totalorder %s187, %s201
      %p203 = scmp.eq.s32.totalorder %s30, 0
      %p204 = por %p202, %p203
      %s206 = sadd.s32 %s205, 1
      %p209 = scmp.eq.s32.totalorder %s24, 3
      %p210 = scmp.ne.s32.totalorder %s205, %s207
      %p211 = scmp.eq.s32.totalorder %s24, 0
      %p212 = por %p210, %p211
      %p213 = scmp.ne.s32.totalorder %s205, %s207
      %p214 = scmp.eq.s32.totalorder %s29, 3
      %p215 = por %p213, %p214
      %p216 = scmp.ne.s32.totalorder %s207, %s208
      %p217 = scmp.eq.s32.totalorder %s29, 0
      %p218 = por %p216, %p217
      %p219 = scmp.ne.s32.totalorder %s207, %s208
      %p220 = scmp.eq.s32.totalorder %s30, 3
      %p221 = por %p219, %p220
      %p223 = scmp.ne.s32.totalorder %s208, %s222
      %p224 = scmp.eq.s32.totalorder %s30, 0
      %p225 = por %p223, %p224
      %s226 = ssub.s32 %s24, %s31
      %p227 = scmp.eq.s32.totalorder %s226, 0
      %s229 = sadd.s32 %s228, 1
      %s230 = scalar_select %p227, %s228, %s229
      %p233 = pneg %p227
      %p234 = scmp.eq.s32.totalorder %s24, 3
      %p235 = por %p233, %p234
      %p236 = scmp.ne.s32.totalorder %s228, %s231
      %p237 = scmp.eq.s32.totalorder %s24, 0
      %p238 = por %p236, %p237
      %p239 = scmp.ne.s32.totalorder %s228, %s231
      %p240 = scmp.eq.s32.totalorder %s29, 3
      %p241 = por %p239, %p240
      %p242 = scmp.ne.s32.totalorder %s231, %s232
      %p243 = scmp.eq.s32.totalorder %s29, 0
      %p244 = por %p242, %p243
      %p245 = scmp.ne.s32.totalorder %s231, %s232
      %p246 = scmp.eq.s32.totalorder %s30, 3
      %p247 = por %p245, %p246
      %p249 = scmp.ne.s32.totalorder %s232, %s248
      %p250 = scmp.eq.s32.totalorder %s30, 0
      %p251 = por %p249, %p250
      %p252 = scmp.le.s32.totalorder 1, %s24
      %p253 = scmp.lt.s32.totalorder %s24, 5
      %p254 = pnand %p252, %p253
      %p255 = pneg %p254
      // Predicated region
      $region9: #{tpu_custom_call.1} parent=5 // pred_check
        _
      $region10: #{tpu_custom_call.1} parent=5 // pred_check_branch
        %257 = sbr.rel (%p254) target = $region12
      $region11: #{tpu_custom_call.1} parent=5 // pred_region
        %s258 = ssub.s32 %s24, 1
        // Predicated region
        $region13: #{tpu_custom_call.1} parent=11 // pred_check
          %p259 = pneg %p71
        $region14: #{tpu_custom_call.1} parent=11 // pred_check_branch
          %261 = sbr.rel (%p259) target = $region16
        $region15: #{tpu_custom_call.1} parent=11 // pred_region
          %263 = vsyncadd [#allocation6], 0
          %s265 = sshll.u32 %s1, 4
          %s266 = int_to_ptr.hbm [resolvable:$true] %s265
          %s267 = sshll.u32 [#allocation5], 4
          %s268 = int_to_ptr.vmem [resolvable:$true] %s267
          %270 = dma.hbm_to_vmem [thread:$0]  %s266, 16, %s268, [#allocation6]
        $region16: #{tpu_custom_call.1} parent=11 // pred_fallthru
          _
        // Predicated region
        $region17: #{tpu_custom_call.1} parent=11 // pred_check
          %p271 = pneg %p92
        $region18: #{tpu_custom_call.1} parent=11 // pred_check_branch
          %273 = sbr.rel (%p271) target = $region20
        $region19: #{tpu_custom_call.1} parent=11 // pred_region
          %275 = vsyncadd [#allocation6], 0
          %s277 = sshll.u32 %s2, 4
          %s278 = int_to_ptr.hbm [resolvable:$true] %s277
          %s279 = sshll.u32 [#allocation7], 4
          %s280 = int_to_ptr.vmem [resolvable:$true] %s279
          %282 = dma.hbm_to_vmem [thread:$0]  %s278, 16, %s280, [#allocation6]
        $region20: #{tpu_custom_call.1} parent=11 // pred_fallthru
          _
        // Predicated region
        $region21: #{tpu_custom_call.1} parent=11 // pred_check
          %p283 = pneg %p113
        $region22: #{tpu_custom_call.1} parent=11 // pred_check_branch
          %285 = sbr.rel (%p283) target = $region24
        $region23: #{tpu_custom_call.1} parent=11 // pred_region
          %287 = vsyncadd [#allocation9], 0
          %s289 = sshll.u32 %s3, 4
          %s290 = int_to_ptr.hbm [resolvable:$true] %s289
          %s291 = sshll.u32 [#allocation8], 4
          %s292 = int_to_ptr.vmem [resolvable:$true] %s291
          %294 = dma.hbm_to_vmem [thread:$0]  %s290, 16, %s292, [#allocation9]
        $region24: #{tpu_custom_call.1} parent=11 // pred_fallthru
          _
        // Predicated region
        $region25: #{tpu_custom_call.1} parent=11 // pred_check
          %p295 = pneg %p134
        $region26: #{tpu_custom_call.1} parent=11 // pred_check_branch
          %297 = sbr.rel (%p295) target = $region28
        $region27: #{tpu_custom_call.1} parent=11 // pred_region
          %299 = vsyncadd [#allocation9], 0
          %s301 = sshll.u32 %s4, 4
          %s302 = int_to_ptr.hbm [resolvable:$true] %s301
          %s303 = sshll.u32 [#allocation10], 4
          %s304 = int_to_ptr.vmem [resolvable:$true] %s303
          %306 = dma.hbm_to_vmem [thread:$0]  %s302, 16, %s304, [#allocation9]
        $region28: #{tpu_custom_call.1} parent=11 // pred_fallthru
          _
        // Predicated region
        $region29: #{tpu_custom_call.1} parent=11 // pred_check
          %p307 = pneg %p155
        $region30: #{tpu_custom_call.1} parent=11 // pred_check_branch
          %309 = sbr.rel (%p307) target = $region32
        $region31: #{tpu_custom_call.1} parent=11 // pred_region
          %311 = vsyncadd [#allocation12], 0
          %s312 = sshll.u32 %s5, 4
          %s313 = int_to_ptr.hbm [resolvable:$true] %s312
          %s314 = sshll.u32 [#allocation11], 4
          %s315 = int_to_ptr.vmem [resolvable:$true] %s314
          %320 = dma.hbm_to_vmem [thread:$0]  %s313, 2048, %s315, [#allocation12], 128, 128, 8
        $region32: #{tpu_custom_call.1} parent=11 // pred_fallthru
          _
        // Predicated region
        $region33: #{tpu_custom_call.1} parent=11 // pred_check
          %p321 = pneg %p176
        $region34: #{tpu_custom_call.1} parent=11 // pred_check_branch
          %323 = sbr.rel (%p321) target = $region36
        $region35: #{tpu_custom_call.1} parent=11 // pred_region
          _
        $region36: #{tpu_custom_call.1} parent=11 // pred_fallthru
          _
        // Predicated region
        $region37: #{tpu_custom_call.1} parent=11 // pred_check
          %p324 = pneg %p197
        $region38: #{tpu_custom_call.1} parent=11 // pred_check_branch
          %326 = sbr.rel (%p324) target = $region40
        $region39: #{tpu_custom_call.1} parent=11 // pred_region
          %328 = vsyncadd [#allocation12], 0
          %s329 = sshll.u32 %s7, 4
          %s330 = int_to_ptr.hbm [resolvable:$true] %s329
          %s331 = sshll.u32 [#allocation13], 4
          %s332 = int_to_ptr.vmem [resolvable:$true] %s331
          %337 = dma.hbm_to_vmem [thread:$0]  %s330, 4096, %s332, [#allocation12], 128, 128, 8
        $region40: #{tpu_custom_call.1} parent=11 // pred_fallthru
          _
        // Predicated region
        $region41: #{tpu_custom_call.1} parent=11 // pred_check
          %p338 = pneg %p218
        $region42: #{tpu_custom_call.1} parent=11 // pred_check_branch
          %340 = sbr.rel (%p338) target = $region44
        $region43: #{tpu_custom_call.1} parent=11 // pred_region
          _
        $region44: #{tpu_custom_call.1} parent=11 // pred_fallthru
          _
      $region12: #{tpu_custom_call.1} parent=5 // pred_fallthru
        _
      %p341 = scmp.lt.s32.totalorder %s24, 4
      // Predicated region
      $region45: #{tpu_custom_call.1} parent=5 // pred_check
        %p342 = pneg %p341
      $region46: #{tpu_custom_call.1} parent=5 // pred_check_branch
        %344 = sbr.rel (%p342) target = $region48
      $region47: #{tpu_custom_call.1} parent=5 // pred_region
        // Predicated region
        $region49: #{tpu_custom_call.1} parent=47 // pred_check
          %p345 = pneg %p44
        $region50: #{tpu_custom_call.1} parent=47 // pred_check_branch
          %347 = sbr.rel (%p345) target = $region52
        $region51: #{tpu_custom_call.1} parent=47 // pred_region
          %s348 = sand.u32 %s34, 1
          %s349 = scalar_lea.sflag [#allocation3], %s348
          %s350 = sand.u32 %s34, 1
          %s351 = smul.addr %s350, 128
          %s352 = scalar_lea.vmem [#allocation2], %s351
          %s353 = smul.u32 16, %s24
          %355 = vsyncadd %s349, 0
          %s356 = smul.addr %s353, 8
          %s357 = scalar_lea.hbm %s0, %s356
          %s358 = sshll.u32 %s357, 4
          %s359 = int_to_ptr.hbm [resolvable:$true] %s358
          %s360 = sshll.u32 %s352, 4
          %s361 = int_to_ptr.vmem [resolvable:$true] %s360
          %366 = dma.hbm_to_vmem [thread:$0]  %s359, 2048, %s361, %s349, 128, 128, 8
        $region52: #{tpu_custom_call.1} parent=47 // pred_fallthru
          _
      $region48: #{tpu_custom_call.1} parent=5 // pred_fallthru
        _
      %p367 = scmp.le.s32.totalorder 1, %s24
      %p368 = scmp.lt.s32.totalorder %s24, 5
      %p369 = pnand %p367, %p368
      %p370 = pneg %p369
      // Predicated region
      $region53: #{tpu_custom_call.1} parent=5 // pred_check
        _
      $region54: #{tpu_custom_call.1} parent=5 // pred_check_branch
        %372 = sbr.rel (%p369) target = $region56
      $region55: #{tpu_custom_call.1} parent=5 // pred_region
        %s373 = ssub.s32 %s24, 1
        %s374 = sand.u32 %s37, 1
        %s375 = scalar_lea.sflag [#allocation3], %s374
        %s376 = sand.u32 %s37, 1
        %s377 = smul.addr %s376, 128
        %s378 = scalar_lea.vmem [#allocation2], %s377
        // Predicated region
        $region57: #{tpu_custom_call.1} parent=55 // pred_check
          %p379 = pneg %p50
        $region58: #{tpu_custom_call.1} parent=55 // pred_check_branch
          %381 = sbr.rel (%p379) target = $region60
        $region59: #{tpu_custom_call.1} parent=55 // pred_region
          %383 = dma.done %s375, 2048
        $region60: #{tpu_custom_call.1} parent=55 // pred_fallthru
          _
        // Predicated region
        $region61: #{tpu_custom_call.1} parent=55 // pred_check
          %p384 = pneg %p71
        $region62: #{tpu_custom_call.1} parent=55 // pred_check_branch
          %386 = sbr.rel (%p384) target = $region64
        $region63: #{tpu_custom_call.1} parent=55 // pred_region
          %388 = dma.done [#allocation6], 16
        $region64: #{tpu_custom_call.1} parent=55 // pred_fallthru
          _
        // Predicated region
        $region65: #{tpu_custom_call.1} parent=55 // pred_check
          %p389 = pneg %p92
        $region66: #{tpu_custom_call.1} parent=55 // pred_check_branch
          %391 = sbr.rel (%p389) target = $region68
        $region67: #{tpu_custom_call.1} parent=55 // pred_region
          %393 = dma.done [#allocation6], 16
        $region68: #{tpu_custom_call.1} parent=55 // pred_fallthru
          _
        // Predicated region
        $region69: #{tpu_custom_call.1} parent=55 // pred_check
          %p394 = pneg %p113
        $region70: #{tpu_custom_call.1} parent=55 // pred_check_branch
          %396 = sbr.rel (%p394) target = $region72
        $region71: #{tpu_custom_call.1} parent=55 // pred_region
          %398 = dma.done [#allocation9], 16
        $region72: #{tpu_custom_call.1} parent=55 // pred_fallthru
          _
        // Predicated region
        $region73: #{tpu_custom_call.1} parent=55 // pred_check
          %p399 = pneg %p134
        $region74: #{tpu_custom_call.1} parent=55 // pred_check_branch
          %401 = sbr.rel (%p399) target = $region76
        $region75: #{tpu_custom_call.1} parent=55 // pred_region
          %403 = dma.done [#allocation9], 16
        $region76: #{tpu_custom_call.1} parent=55 // pred_fallthru
          _
        // Predicated region
        $region77: #{tpu_custom_call.1} parent=55 // pred_check
          %p404 = pneg %p155
        $region78: #{tpu_custom_call.1} parent=55 // pred_check_branch
          %406 = sbr.rel (%p404) target = $region80
        $region79: #{tpu_custom_call.1} parent=55 // pred_region
          %408 = dma.done [#allocation12], 2048
        $region80: #{tpu_custom_call.1} parent=55 // pred_fallthru
          _
        // Predicated region
        $region81: #{tpu_custom_call.1} parent=55 // pred_check
          %p409 = pneg %p197
        $region82: #{tpu_custom_call.1} parent=55 // pred_check_branch
          %411 = sbr.rel (%p409) target = $region84
        $region83: #{tpu_custom_call.1} parent=55 // pred_region
          %413 = dma.done [#allocation12], 4096
        $region84: #{tpu_custom_call.1} parent=55 // pred_fallthru
          _
        %s414 = sand.u32 %s37, 1
        %s415 = scalar_lea.sflag [#allocation3], %s414
        %s416 = sand.u32 %s37, 1
        %s417 = smul.addr %s416, 128
        %s418 = scalar_lea.vmem [#allocation2], %s417
        %p419 = pneg %p50
        %p420 = pneg %p47
        %p421 = pneg %p71
        %p422 = pneg %p68
        %p423 = pneg %p92
        %p424 = pneg %p89
        %p425 = pneg %p113
        %p426 = pneg %p110
        %p427 = pneg %p134
        %p428 = pneg %p131
        %p429 = pneg %p155
        %p430 = pneg %p152
        %p431 = pneg %p176
        %p432 = pneg %p173
        %p433 = pneg %p197
        %p434 = pneg %p194
        %p435 = pneg %p218
        %p436 = pneg %p215
        %p437 = pneg %p244
        %p438 = pneg %p241
        %s439 = sand.u32 %s231, 1
        %s440 = scalar_lea.sflag [#allocation4], %s439
        %s441 = sand.u32 %s231, 1
        %s442 = smul.addr %s441, 128
        %s443 = scalar_lea.vmem [#allocation14], %s442
        %s444 = smul.u32 16, %s29
        %s445 = smul.u32 16, %s29
        %v446 = vld [vmem:[%s378] sm:$0xff]
        %v447 = vld [vmem:[%s378 + $0x8] sm:$0xff]
        %v448 = vld [vmem:[%s378 + $0x10] sm:$0xff]
        %v449 = vld [vmem:[%s378 + $0x18] sm:$0xff]
        %v450 = vld [vmem:[%s378 + $0x20] sm:$0xff]
        %v451 = vld [vmem:[%s378 + $0x28] sm:$0xff]
        %v452 = vld [vmem:[%s378 + $0x30] sm:$0xff]
        %v453 = vld [vmem:[%s378 + $0x38] sm:$0xff]
        %v454 = vld [vmem:[%s378 + $0x40] sm:$0xff]
        %v455 = vld [vmem:[%s378 + $0x48] sm:$0xff]
        %v456 = vld [vmem:[%s378 + $0x50] sm:$0xff]
        %v457 = vld [vmem:[%s378 + $0x58] sm:$0xff]
        %v458 = vld [vmem:[%s378 + $0x60] sm:$0xff]
        %v459 = vld [vmem:[%s378 + $0x68] sm:$0xff]
        %v460 = vld [vmem:[%s378 + $0x70] sm:$0xff]
        %v461 = vld [vmem:[%s378 + $0x78] sm:$0xff]
        %v462 = vld [vmem:[#allocation5] sm:$0x1]
        %v463 = vld [vmem:[#allocation7] sm:$0x1]
        %v464 = vld [vmem:[#allocation8] sm:$0x1]
        %v465 = vld [vmem:[#allocation10] sm:$0x1]
        %v466 = vld [vmem:[%s6] sm:$0x3]
        %v467 = vld [vmem:[%s8] sm:$0x3]
        %468 = vadd.xlane.f32.xlu0 %v446
        %v469 = vpop.xlane.xlu0 %468
        %470 = vadd.xlane.f32.xlu0 %v447
        %v471 = vpop.xlane.xlu0 %470
        %472 = vadd.xlane.f32.xlu0 %v448
        %v473 = vpop.xlane.xlu0 %472
        %474 = vadd.xlane.f32.xlu0 %v449
        %v475 = vpop.xlane.xlu0 %474
        %476 = vadd.xlane.f32.xlu0 %v450
        %v477 = vpop.xlane.xlu0 %476
        %478 = vadd.xlane.f32.xlu0 %v451
        %v479 = vpop.xlane.xlu0 %478
        %480 = vadd.xlane.f32.xlu0 %v452
        %v481 = vpop.xlane.xlu0 %480
        %482 = vadd.xlane.f32.xlu0 %v453
        %v483 = vpop.xlane.xlu0 %482
        %484 = vadd.xlane.f32.xlu0 %v454
        %v485 = vpop.xlane.xlu0 %484
        %486 = vadd.xlane.f32.xlu0 %v455
        %v487 = vpop.xlane.xlu0 %486
        %488 = vadd.xlane.f32.xlu0 %v456
        %v489 = vpop.xlane.xlu0 %488
        %490 = vadd.xlane.f32.xlu0 %v457
        %v491 = vpop.xlane.xlu0 %490
        %492 = vadd.xlane.f32.xlu0 %v458
        %v493 = vpop.xlane.xlu0 %492
        %494 = vadd.xlane.f32.xlu0 %v459
        %v495 = vpop.xlane.xlu0 %494
        %496 = vadd.xlane.f32.xlu0 %v460
        %v497 = vpop.xlane.xlu0 %496
        %498 = vadd.xlane.f32.xlu0 %v461
        %v499 = vpop.xlane.xlu0 %498
        %v500 = vrcp.pop 128.0
        %v501 = vmul.f32 128.0, %v500
        %v502 = vsub.f32 1.0, %v501
        %v503 = vmul.f32 %v500, %v502
        %v504 = vadd.f32 %v500, %v503
        %vm505 = vweird.f32 %v500
        %v506 = vsel %vm505, %v500, %v504
        %v507 = vmul.f32 %v469, %v506
        %v508 = vmul.f32 %v471, %v506
        %v509 = vmul.f32 %v473, %v506
        %v510 = vmul.f32 %v475, %v506
        %v511 = vmul.f32 %v477, %v506
        %v512 = vmul.f32 %v479, %v506
        %v513 = vmul.f32 %v481, %v506
        %v514 = vmul.f32 %v483, %v506
        %v515 = vmul.f32 %v485, %v506
        %v516 = vmul.f32 %v487, %v506
        %v517 = vmul.f32 %v489, %v506
        %v518 = vmul.f32 %v491, %v506
        %v519 = vmul.f32 %v493, %v506
        %v520 = vmul.f32 %v495, %v506
        %v521 = vmul.f32 %v497, %v506
        %v522 = vmul.f32 %v499, %v506
        %v523 = vmul.f32 %v446, %v446
        %v524 = vmul.f32 %v447, %v447
        %v525 = vmul.f32 %v448, %v448
        %v526 = vmul.f32 %v449, %v449
        %v527 = vmul.f32 %v450, %v450
        %v528 = vmul.f32 %v451, %v451
        %v529 = vmul.f32 %v452, %v452
        %v530 = vmul.f32 %v453, %v453
        %v531 = vmul.f32 %v454, %v454
        %v532 = vmul.f32 %v455, %v455
        %v533 = vmul.f32 %v456, %v456
        %v534 = vmul.f32 %v457, %v457
        %v535 = vmul.f32 %v458, %v458
        %v536 = vmul.f32 %v459, %v459
        %v537 = vmul.f32 %v460, %v460
        %v538 = vmul.f32 %v461, %v461
        %539 = vadd.xlane.f32.xlu0 %v523
        %v540 = vpop.xlane.xlu0 %539
        %541 = vadd.xlane.f32.xlu0 %v524
        %v542 = vpop.xlane.xlu0 %541
        %543 = vadd.xlane.f32.xlu0 %v525
        %v544 = vpop.xlane.xlu0 %543
        %545 = vadd.xlane.f32.xlu0 %v526
        %v546 = vpop.xlane.xlu0 %545
        %547 = vadd.xlane.f32.xlu0 %v527
        %v548 = vpop.xlane.xlu0 %547
        %549 = vadd.xlane.f32.xlu0 %v528
        %v550 = vpop.xlane.xlu0 %549
        %551 = vadd.xlane.f32.xlu0 %v529
        %v552 = vpop.xlane.xlu0 %551
        %553 = vadd.xlane.f32.xlu0 %v530
        %v554 = vpop.xlane.xlu0 %553
        %555 = vadd.xlane.f32.xlu0 %v531
        %v556 = vpop.xlane.xlu0 %555
        %557 = vadd.xlane.f32.xlu0 %v532
        %v558 = vpop.xlane.xlu0 %557
        %559 = vadd.xlane.f32.xlu0 %v533
        %v560 = vpop.xlane.xlu0 %559
        %561 = vadd.xlane.f32.xlu0 %v534
        %v562 = vpop.xlane.xlu0 %561
        %563 = vadd.xlane.f32.xlu0 %v535
        %v564 = vpop.xlane.xlu0 %563
        %565 = vadd.xlane.f32.xlu0 %v536
        %v566 = vpop.xlane.xlu0 %565
        %567 = vadd.xlane.f32.xlu0 %v537
        %v568 = vpop.xlane.xlu0 %567
        %569 = vadd.xlane.f32.xlu0 %v538
        %v570 = vpop.xlane.xlu0 %569
        %v571 = vmul.f32 %v540, %v506
        %v572 = vmul.f32 %v542, %v506
        %v573 = vmul.f32 %v544, %v506
        %v574 = vmul.f32 %v546, %v506
        %v575 = vmul.f32 %v548, %v506
        %v576 = vmul.f32 %v550, %v506
        %v577 = vmul.f32 %v552, %v506
        %v578 = vmul.f32 %v554, %v506
        %v579 = vmul.f32 %v556, %v506
        %v580 = vmul.f32 %v558, %v506
        %v581 = vmul.f32 %v560, %v506
        %v582 = vmul.f32 %v562, %v506
        %v583 = vmul.f32 %v564, %v506
        %v584 = vmul.f32 %v566, %v506
        %v585 = vmul.f32 %v568, %v506
        %v586 = vmul.f32 %v570, %v506
        %v587 = vmul.f32 %v507, %v507
        %v588 = vmul.f32 %v508, %v508
        %v589 = vmul.f32 %v509, %v509
        %v590 = vmul.f32 %v510, %v510
        %v591 = vmul.f32 %v511, %v511
        %v592 = vmul.f32 %v512, %v512
        %v593 = vmul.f32 %v513, %v513
        %v594 = vmul.f32 %v514, %v514
        %v595 = vmul.f32 %v515, %v515
        %v596 = vmul.f32 %v516, %v516
        %v597 = vmul.f32 %v517, %v517
        %v598 = vmul.f32 %v518, %v518
        %v599 = vmul.f32 %v519, %v519
        %v600 = vmul.f32 %v520, %v520
        %v601 = vmul.f32 %v521, %v521
        %v602 = vmul.f32 %v522, %v522
        %v603 = vsub.f32 %v571, %v587
        %v604 = vsub.f32 %v572, %v588
        %v605 = vsub.f32 %v573, %v589
        %v606 = vsub.f32 %v574, %v590
        %v607 = vsub.f32 %v575, %v591
        %v608 = vsub.f32 %v576, %v592
        %v609 = vsub.f32 %v577, %v593
        %v610 = vsub.f32 %v578, %v594
        %v611 = vsub.f32 %v579, %v595
        %v612 = vsub.f32 %v580, %v596
        %v613 = vsub.f32 %v581, %v597
        %v614 = vsub.f32 %v582, %v598
        %v615 = vsub.f32 %v583, %v599
        %v616 = vsub.f32 %v584, %v600
        %v617 = vsub.f32 %v585, %v601
        %v618 = vsub.f32 %v586, %v602
        %v619 = vsub.f32 %v446, %v507
        %v620 = vsub.f32 %v447, %v508
        %v621 = vsub.f32 %v448, %v509
        %v622 = vsub.f32 %v449, %v510
        %v623 = vsub.f32 %v450, %v511
        %v624 = vsub.f32 %v451, %v512
        %v625 = vsub.f32 %v452, %v513
        %v626 = vsub.f32 %v453, %v514
        %v627 = vsub.f32 %v454, %v515
        %v628 = vsub.f32 %v455, %v516
        %v629 = vsub.f32 %v456, %v517
        %v630 = vsub.f32 %v457, %v518
        %v631 = vsub.f32 %v458, %v519
        %v632 = vsub.f32 %v459, %v520
        %v633 = vsub.f32 %v460, %v521
        %v634 = vsub.f32 %v461, %v522
        %v635 = vadd.f32 %v603, 1e-05
        %v636 = vadd.f32 %v604, 1e-05
        %v637 = vadd.f32 %v605, 1e-05
        %v638 = vadd.f32 %v606, 1e-05
        %v639 = vadd.f32 %v607, 1e-05
        %v640 = vadd.f32 %v608, 1e-05
        %v641 = vadd.f32 %v609, 1e-05
        %v642 = vadd.f32 %v610, 1e-05
        %v643 = vadd.f32 %v611, 1e-05
        %v644 = vadd.f32 %v612, 1e-05
        %v645 = vadd.f32 %v613, 1e-05
        %v646 = vadd.f32 %v614, 1e-05
        %v647 = vadd.f32 %v615, 1e-05
        %v648 = vadd.f32 %v616, 1e-05
        %v649 = vadd.f32 %v617, 1e-05
        %v650 = vadd.f32 %v618, 1e-05
        %v651 = vrsqrt.pop %v635
        %v652 = vmul.f32 %v651, %v635
        %v653 = vmul.f32 %v652, %v651
        %v654 = vmul.f32 0.5, %v653
        %v655 = vsub.f32 1.5, %v654
        %v656 = vmul.f32 %v651, %v655
        %vm657 = vweird.f32 %v635
        %vm658 = vweird.f32 %v651
        %vm659 = vmor %vm657, %vm658
        %v660 = vsel %vm659, %v651, %v656
        %v661 = vrsqrt.pop %v636
        %v662 = vmul.f32 %v661, %v636
        %v663 = vmul.f32 %v662, %v661
        %v664 = vmul.f32 0.5, %v663
        %v665 = vsub.f32 1.5, %v664
        %v666 = vmul.f32 %v661, %v665
        %vm667 = vweird.f32 %v636
        %vm668 = vweird.f32 %v661
        %vm669 = vmor %vm667, %vm668
        %v670 = vsel %vm669, %v661, %v666
        %v671 = vrsqrt.pop %v637
        %v672 = vmul.f32 %v671, %v637
        %v673 = vmul.f32 %v672, %v671
        %v674 = vmul.f32 0.5, %v673
        %v675 = vsub.f32 1.5, %v674
        %v676 = vmul.f32 %v671, %v675
        %vm677 = vweird.f32 %v637
        %vm678 = vweird.f32 %v671
        %vm679 = vmor %vm677, %vm678
        %v680 = vsel %vm679, %v671, %v676
        %v681 = vrsqrt.pop %v638
        %v682 = vmul.f32 %v681, %v638
        %v683 = vmul.f32 %v682, %v681
        %v684 = vmul.f32 0.5, %v683
        %v685 = vsub.f32 1.5, %v684
        %v686 = vmul.f32 %v681, %v685
        %vm687 = vweird.f32 %v638
        %vm688 = vweird.f32 %v681
        %vm689 = vmor %vm687, %vm688
        %v690 = vsel %vm689, %v681, %v686
        %v691 = vrsqrt.pop %v639
        %v692 = vmul.f32 %v691, %v639
        %v693 = vmul.f32 %v692, %v691
        %v694 = vmul.f32 0.5, %v693
        %v695 = vsub.f32 1.5, %v694
        %v696 = vmul.f32 %v691, %v695
        %vm697 = vweird.f32 %v639
        %vm698 = vweird.f32 %v691
        %vm699 = vmor %vm697, %vm698
        %v700 = vsel %vm699, %v691, %v696
        %v701 = vrsqrt.pop %v640
        %v702 = vmul.f32 %v701, %v640
        %v703 = vmul.f32 %v702, %v701
        %v704 = vmul.f32 0.5, %v703
        %v705 = vsub.f32 1.5, %v704
        %v706 = vmul.f32 %v701, %v705
        %vm707 = vweird.f32 %v640
        %vm708 = vweird.f32 %v701
        %vm709 = vmor %vm707, %vm708
        %v710 = vsel %vm709, %v701, %v706
        %v711 = vrsqrt.pop %v641
        %v712 = vmul.f32 %v711, %v641
        %v713 = vmul.f32 %v712, %v711
        %v714 = vmul.f32 0.5, %v713
        %v715 = vsub.f32 1.5, %v714
        %v716 = vmul.f32 %v711, %v715
        %vm717 = vweird.f32 %v641
        %vm718 = vweird.f32 %v711
        %vm719 = vmor %vm717, %vm718
        %v720 = vsel %vm719, %v711, %v716
        %v721 = vrsqrt.pop %v642
        %v722 = vmul.f32 %v721, %v642
        %v723 = vmul.f32 %v722, %v721
        %v724 = vmul.f32 0.5, %v723
        %v725 = vsub.f32 1.5, %v724
        %v726 = vmul.f32 %v721, %v725
        %vm727 = vweird.f32 %v642
        %vm728 = vweird.f32 %v721
        %vm729 = vmor %vm727, %vm728
        %v730 = vsel %vm729, %v721, %v726
        %v731 = vrsqrt.pop %v643
        %v732 = vmul.f32 %v731, %v643
        %v733 = vmul.f32 %v732, %v731
        %v734 = vmul.f32 0.5, %v733
        %v735 = vsub.f32 1.5, %v734
        %v736 = vmul.f32 %v731, %v735
        %vm737 = vweird.f32 %v643
        %vm738 = vweird.f32 %v731
        %vm739 = vmor %vm737, %vm738
        %v740 = vsel %vm739, %v731, %v736
        %v741 = vrsqrt.pop %v644
        %v742 = vmul.f32 %v741, %v644
        %v743 = vmul.f32 %v742, %v741
        %v744 = vmul.f32 0.5, %v743
        %v745 = vsub.f32 1.5, %v744
        %v746 = vmul.f32 %v741, %v745
        %vm747 = vweird.f32 %v644
        %vm748 = vweird.f32 %v741
        %vm749 = vmor %vm747, %vm748
        %v750 = vsel %vm749, %v741, %v746
        %v751 = vrsqrt.pop %v645
        %v752 = vmul.f32 %v751, %v645
        %v753 = vmul.f32 %v752, %v751
        %v754 = vmul.f32 0.5, %v753
        %v755 = vsub.f32 1.5, %v754
        %v756 = vmul.f32 %v751, %v755
        %vm757 = vweird.f32 %v645
        %vm758 = vweird.f32 %v751
        %vm759 = vmor %vm757, %vm758
        %v760 = vsel %vm759, %v751, %v756
        %v761 = vrsqrt.pop %v646
        %v762 = vmul.f32 %v761, %v646
        %v763 = vmul.f32 %v762, %v761
        %v764 = vmul.f32 0.5, %v763
        %v765 = vsub.f32 1.5, %v764
        %v766 = vmul.f32 %v761, %v765
        %vm767 = vweird.f32 %v646
        %vm768 = vweird.f32 %v761
        %vm769 = vmor %vm767, %vm768
        %v770 = vsel %vm769, %v761, %v766
        %v771 = vrsqrt.pop %v647
        %v772 = vmul.f32 %v771, %v647
        %v773 = vmul.f32 %v772, %v771
        %v774 = vmul.f32 0.5, %v773
        %v775 = vsub.f32 1.5, %v774
        %v776 = vmul.f32 %v771, %v775
        %vm777 = vweird.f32 %v647
        %vm778 = vweird.f32 %v771
        %vm779 = vmor %vm777, %vm778
        %v780 = vsel %vm779, %v771, %v776
        %v781 = vrsqrt.pop %v648
        %v782 = vmul.f32 %v781, %v648
        %v783 = vmul.f32 %v782, %v781
        %v784 = vmul.f32 0.5, %v783
        %v785 = vsub.f32 1.5, %v784
        %v786 = vmul.f32 %v781, %v785
        %vm787 = vweird.f32 %v648
        %vm788 = vweird.f32 %v781
        %vm789 = vmor %vm787, %vm788
        %v790 = vsel %vm789, %v781, %v786
        %v791 = vrsqrt.pop %v649
        %v792 = vmul.f32 %v791, %v649
        %v793 = vmul.f32 %v792, %v791
        %v794 = vmul.f32 0.5, %v793
        %v795 = vsub.f32 1.5, %v794
        %v796 = vmul.f32 %v791, %v795
        %vm797 = vweird.f32 %v649
        %vm798 = vweird.f32 %v791
        %vm799 = vmor %vm797, %vm798
        %v800 = vsel %vm799, %v791, %v796
        %v801 = vrsqrt.pop %v650
        %v802 = vmul.f32 %v801, %v650
        %v803 = vmul.f32 %v802, %v801
        %v804 = vmul.f32 0.5, %v803
        %v805 = vsub.f32 1.5, %v804
        %v806 = vmul.f32 %v801, %v805
        %vm807 = vweird.f32 %v650
        %vm808 = vweird.f32 %v801
        %vm809 = vmor %vm807, %vm808
        %v810 = vsel %vm809, %v801, %v806
        %v811 = vmul.f32 %v619, %v660
        %v812 = vmul.f32 %v620, %v670
        %v813 = vmul.f32 %v621, %v680
        %v814 = vmul.f32 %v622, %v690
        %v815 = vmul.f32 %v623, %v700
        %v816 = vmul.f32 %v624, %v710
        %v817 = vmul.f32 %v625, %v720
        %v818 = vmul.f32 %v626, %v730
        %v819 = vmul.f32 %v627, %v740
        %v820 = vmul.f32 %v628, %v750
        %v821 = vmul.f32 %v629, %v760
        %v822 = vmul.f32 %v630, %v770
        %v823 = vmul.f32 %v631, %v780
        %v824 = vmul.f32 %v632, %v790
        %v825 = vmul.f32 %v633, %v800
        %v826 = vmul.f32 %v634, %v810
        %v828 = vperm.slane %v462, 0
        %v830 = vmul.f32 %v811, %v828
        %v831 = vmul.f32 %v812, %v828
        %v832 = vmul.f32 %v813, %v828
        %v833 = vmul.f32 %v814, %v828
        %v834 = vmul.f32 %v815, %v828
        %v835 = vmul.f32 %v816, %v828
        %v836 = vmul.f32 %v817, %v828
        %v837 = vmul.f32 %v818, %v828
        %v838 = vmul.f32 %v819, %v828
        %v839 = vmul.f32 %v820, %v828
        %v840 = vmul.f32 %v821, %v828
        %v841 = vmul.f32 %v822, %v828
        %v842 = vmul.f32 %v823, %v828
        %v843 = vmul.f32 %v824, %v828
        %v844 = vmul.f32 %v825, %v828
        %v845 = vmul.f32 %v826, %v828
        %v847 = vperm.slane %v463, 0
        %v849 = vadd.f32 %v830, %v847
        %v850 = vadd.f32 %v831, %v847
        %v851 = vadd.f32 %v832, %v847
        %v852 = vadd.f32 %v833, %v847
        %v853 = vadd.f32 %v834, %v847
        %v854 = vadd.f32 %v835, %v847
        %v855 = vadd.f32 %v836, %v847
        %v856 = vadd.f32 %v837, %v847
        %v857 = vadd.f32 %v838, %v847
        %v858 = vadd.f32 %v839, %v847
        %v859 = vadd.f32 %v840, %v847
        %v860 = vadd.f32 %v841, %v847
        %v861 = vadd.f32 %v842, %v847
        %v862 = vadd.f32 %v843, %v847
        %v863 = vadd.f32 %v844, %v847
        %v864 = vadd.f32 %v845, %v847
        %v865 = vadd.f32 %v849, %v446
        %v866 = vadd.f32 %v850, %v447
        %v867 = vadd.f32 %v851, %v448
        %v868 = vadd.f32 %v852, %v449
        %v869 = vadd.f32 %v853, %v450
        %v870 = vadd.f32 %v854, %v451
        %v871 = vadd.f32 %v855, %v452
        %v872 = vadd.f32 %v856, %v453
        %v873 = vadd.f32 %v857, %v454
        %v874 = vadd.f32 %v858, %v455
        %v875 = vadd.f32 %v859, %v456
        %v876 = vadd.f32 %v860, %v457
        %v877 = vadd.f32 %v861, %v458
        %v878 = vadd.f32 %v862, %v459
        %v879 = vadd.f32 %v863, %v460
        %v880 = vadd.f32 %v864, %v461
        %881 = vadd.xlane.f32.xlu0 %v865
        %v882 = vpop.xlane.xlu0 %881
        %883 = vadd.xlane.f32.xlu0 %v866
        %v884 = vpop.xlane.xlu0 %883
        %885 = vadd.xlane.f32.xlu0 %v867
        %v886 = vpop.xlane.xlu0 %885
        %887 = vadd.xlane.f32.xlu0 %v868
        %v888 = vpop.xlane.xlu0 %887
        %889 = vadd.xlane.f32.xlu0 %v869
        %v890 = vpop.xlane.xlu0 %889
        %891 = vadd.xlane.f32.xlu0 %v870
        %v892 = vpop.xlane.xlu0 %891
        %893 = vadd.xlane.f32.xlu0 %v871
        %v894 = vpop.xlane.xlu0 %893
        %895 = vadd.xlane.f32.xlu0 %v872
        %v896 = vpop.xlane.xlu0 %895
        %897 = vadd.xlane.f32.xlu0 %v873
        %v898 = vpop.xlane.xlu0 %897
        %899 = vadd.xlane.f32.xlu0 %v874
        %v900 = vpop.xlane.xlu0 %899
        %901 = vadd.xlane.f32.xlu0 %v875
        %v902 = vpop.xlane.xlu0 %901
        %903 = vadd.xlane.f32.xlu0 %v876
        %v904 = vpop.xlane.xlu0 %903
        %905 = vadd.xlane.f32.xlu0 %v877
        %v906 = vpop.xlane.xlu0 %905
        %907 = vadd.xlane.f32.xlu0 %v878
        %v908 = vpop.xlane.xlu0 %907
        %909 = vadd.xlane.f32.xlu0 %v879
        %v910 = vpop.xlane.xlu0 %909
        %911 = vadd.xlane.f32.xlu0 %v880
        %v912 = vpop.xlane.xlu0 %911
        %v913 = vmul.f32 %v882, %v506
        %v914 = vmul.f32 %v884, %v506
        %v915 = vmul.f32 %v886, %v506
        %v916 = vmul.f32 %v888, %v506
        %v917 = vmul.f32 %v890, %v506
        %v918 = vmul.f32 %v892, %v506
        %v919 = vmul.f32 %v894, %v506
        %v920 = vmul.f32 %v896, %v506
        %v921 = vmul.f32 %v898, %v506
        %v922 = vmul.f32 %v900, %v506
        %v923 = vmul.f32 %v902, %v506
        %v924 = vmul.f32 %v904, %v506
        %v925 = vmul.f32 %v906, %v506
        %v926 = vmul.f32 %v908, %v506
        %v927 = vmul.f32 %v910, %v506
        %v928 = vmul.f32 %v912, %v506
        %v929 = vmul.f32 %v865, %v865
        %v930 = vmul.f32 %v866, %v866
        %v931 = vmul.f32 %v867, %v867
        %v932 = vmul.f32 %v868, %v868
        %v933 = vmul.f32 %v869, %v869
        %v934 = vmul.f32 %v870, %v870
        %v935 = vmul.f32 %v871, %v871
        %v936 = vmul.f32 %v872, %v872
        %v937 = vmul.f32 %v873, %v873
        %v938 = vmul.f32 %v874, %v874
        %v939 = vmul.f32 %v875, %v875
        %v940 = vmul.f32 %v876, %v876
        %v941 = vmul.f32 %v877, %v877
        %v942 = vmul.f32 %v878, %v878
        %v943 = vmul.f32 %v879, %v879
        %v944 = vmul.f32 %v880, %v880
        %945 = vadd.xlane.f32.xlu0 %v929
        %v946 = vpop.xlane.xlu0 %945
        %947 = vadd.xlane.f32.xlu0 %v930
        %v948 = vpop.xlane.xlu0 %947
        %949 = vadd.xlane.f32.xlu0 %v931
        %v950 = vpop.xlane.xlu0 %949
        %951 = vadd.xlane.f32.xlu0 %v932
        %v952 = vpop.xlane.xlu0 %951
        %953 = vadd.xlane.f32.xlu0 %v933
        %v954 = vpop.xlane.xlu0 %953
        %955 = vadd.xlane.f32.xlu0 %v934
        %v956 = vpop.xlane.xlu0 %955
        %957 = vadd.xlane.f32.xlu0 %v935
        %v958 = vpop.xlane.xlu0 %957
        %959 = vadd.xlane.f32.xlu0 %v936
        %v960 = vpop.xlane.xlu0 %959
        %961 = vadd.xlane.f32.xlu0 %v937
        %v962 = vpop.xlane.xlu0 %961
        %963 = vadd.xlane.f32.xlu0 %v938
        %v964 = vpop.xlane.xlu0 %963
        %965 = vadd.xlane.f32.xlu0 %v939
        %v966 = vpop.xlane.xlu0 %965
        %967 = vadd.xlane.f32.xlu0 %v940
        %v968 = vpop.xlane.xlu0 %967
        %969 = vadd.xlane.f32.xlu0 %v941
        %v970 = vpop.xlane.xlu0 %969
        %971 = vadd.xlane.f32.xlu0 %v942
        %v972 = vpop.xlane.xlu0 %971
        %973 = vadd.xlane.f32.xlu0 %v943
        %v974 = vpop.xlane.xlu0 %973
        %975 = vadd.xlane.f32.xlu0 %v944
        %v976 = vpop.xlane.xlu0 %975
        %v977 = vmul.f32 %v946, %v506
        %v978 = vmul.f32 %v948, %v506
        %v979 = vmul.f32 %v950, %v506
        %v980 = vmul.f32 %v952, %v506
        %v981 = vmul.f32 %v954, %v506
        %v982 = vmul.f32 %v956, %v506
        %v983 = vmul.f32 %v958, %v506
        %v984 = vmul.f32 %v960, %v506
        %v985 = vmul.f32 %v962, %v506
        %v986 = vmul.f32 %v964, %v506
        %v987 = vmul.f32 %v966, %v506
        %v988 = vmul.f32 %v968, %v506
        %v989 = vmul.f32 %v970, %v506
        %v990 = vmul.f32 %v972, %v506
        %v991 = vmul.f32 %v974, %v506
        %v992 = vmul.f32 %v976, %v506
        %v993 = vmul.f32 %v913, %v913
        %v994 = vmul.f32 %v914, %v914
        %v995 = vmul.f32 %v915, %v915
        %v996 = vmul.f32 %v916, %v916
        %v997 = vmul.f32 %v917, %v917
        %v998 = vmul.f32 %v918, %v918
        %v999 = vmul.f32 %v919, %v919
        %v1000 = vmul.f32 %v920, %v920
        %v1001 = vmul.f32 %v921, %v921
        %v1002 = vmul.f32 %v922, %v922
        %v1003 = vmul.f32 %v923, %v923
        %v1004 = vmul.f32 %v924, %v924
        %v1005 = vmul.f32 %v925, %v925
        %v1006 = vmul.f32 %v926, %v926
        %v1007 = vmul.f32 %v927, %v927
        %v1008 = vmul.f32 %v928, %v928
        %v1009 = vsub.f32 %v977, %v993
        %v1010 = vsub.f32 %v978, %v994
        %v1011 = vsub.f32 %v979, %v995
        %v1012 = vsub.f32 %v980, %v996
        %v1013 = vsub.f32 %v981, %v997
        %v1014 = vsub.f32 %v982, %v998
        %v1015 = vsub.f32 %v983, %v999
        %v1016 = vsub.f32 %v984, %v1000
        %v1017 = vsub.f32 %v985, %v1001
        %v1018 = vsub.f32 %v986, %v1002
        %v1019 = vsub.f32 %v987, %v1003
        %v1020 = vsub.f32 %v988, %v1004
        %v1021 = vsub.f32 %v989, %v1005
        %v1022 = vsub.f32 %v990, %v1006
        %v1023 = vsub.f32 %v991, %v1007
        %v1024 = vsub.f32 %v992, %v1008
        %v1025 = vsub.f32 %v865, %v913
        %v1026 = vsub.f32 %v866, %v914
        %v1027 = vsub.f32 %v867, %v915
        %v1028 = vsub.f32 %v868, %v916
        %v1029 = vsub.f32 %v869, %v917
        %v1030 = vsub.f32 %v870, %v918
        %v1031 = vsub.f32 %v871, %v919
        %v1032 = vsub.f32 %v872, %v920
        %v1033 = vsub.f32 %v873, %v921
        %v1034 = vsub.f32 %v874, %v922
        %v1035 = vsub.f32 %v875, %v923
        %v1036 = vsub.f32 %v876, %v924
        %v1037 = vsub.f32 %v877, %v925
        %v1038 = vsub.f32 %v878, %v926
        %v1039 = vsub.f32 %v879, %v927
        %v1040 = vsub.f32 %v880, %v928
        %v1041 = vadd.f32 %v1009, 1e-05
        %v1042 = vadd.f32 %v1010, 1e-05
        %v1043 = vadd.f32 %v1011, 1e-05
        %v1044 = vadd.f32 %v1012, 1e-05
        %v1045 = vadd.f32 %v1013, 1e-05
        %v1046 = vadd.f32 %v1014, 1e-05
        %v1047 = vadd.f32 %v1015, 1e-05
        %v1048 = vadd.f32 %v1016, 1e-05
        %v1049 = vadd.f32 %v1017, 1e-05
        %v1050 = vadd.f32 %v1018, 1e-05
        %v1051 = vadd.f32 %v1019, 1e-05
        %v1052 = vadd.f32 %v1020, 1e-05
        %v1053 = vadd.f32 %v1021, 1e-05
        %v1054 = vadd.f32 %v1022, 1e-05
        %v1055 = vadd.f32 %v1023, 1e-05
        %v1056 = vadd.f32 %v1024, 1e-05
        %v1057 = vrsqrt.pop %v1041
        %v1058 = vmul.f32 %v1057, %v1041
        %v1059 = vmul.f32 %v1058, %v1057
        %v1060 = vmul.f32 0.5, %v1059
        %v1061 = vsub.f32 1.5, %v1060
        %v1062 = vmul.f32 %v1057, %v1061
        %vm1063 = vweird.f32 %v1041
        %vm1064 = vweird.f32 %v1057
        %vm1065 = vmor %vm1063, %vm1064
        %v1066 = vsel %vm1065, %v1057, %v1062
        %v1067 = vrsqrt.pop %v1042
        %v1068 = vmul.f32 %v1067, %v1042
        %v1069 = vmul.f32 %v1068, %v1067
        %v1070 = vmul.f32 0.5, %v1069
        %v1071 = vsub.f32 1.5, %v1070
        %v1072 = vmul.f32 %v1067, %v1071
        %vm1073 = vweird.f32 %v1042
        %vm1074 = vweird.f32 %v1067
        %vm1075 = vmor %vm1073, %vm1074
        %v1076 = vsel %vm1075, %v1067, %v1072
        %v1077 = vrsqrt.pop %v1043
        %v1078 = vmul.f32 %v1077, %v1043
        %v1079 = vmul.f32 %v1078, %v1077
        %v1080 = vmul.f32 0.5, %v1079
        %v1081 = vsub.f32 1.5, %v1080
        %v1082 = vmul.f32 %v1077, %v1081
        %vm1083 = vweird.f32 %v1043
        %vm1084 = vweird.f32 %v1077
        %vm1085 = vmor %vm1083, %vm1084
        %v1086 = vsel %vm1085, %v1077, %v1082
        %v1087 = vrsqrt.pop %v1044
        %v1088 = vmul.f32 %v1087, %v1044
        %v1089 = vmul.f32 %v1088, %v1087
        %v1090 = vmul.f32 0.5, %v1089
        %v1091 = vsub.f32 1.5, %v1090
        %v1092 = vmul.f32 %v1087, %v1091
        %vm1093 = vweird.f32 %v1044
        %vm1094 = vweird.f32 %v1087
        %vm1095 = vmor %vm1093, %vm1094
        %v1096 = vsel %vm1095, %v1087, %v1092
        %v1097 = vrsqrt.pop %v1045
        %v1098 = vmul.f32 %v1097, %v1045
        %v1099 = vmul.f32 %v1098, %v1097
        %v1100 = vmul.f32 0.5, %v1099
        %v1101 = vsub.f32 1.5, %v1100
        %v1102 = vmul.f32 %v1097, %v1101
        %vm1103 = vweird.f32 %v1045
        %vm1104 = vweird.f32 %v1097
        %vm1105 = vmor %vm1103, %vm1104
        %v1106 = vsel %vm1105, %v1097, %v1102
        %v1107 = vrsqrt.pop %v1046
        %v1108 = vmul.f32 %v1107, %v1046
        %v1109 = vmul.f32 %v1108, %v1107
        %v1110 = vmul.f32 0.5, %v1109
        %v1111 = vsub.f32 1.5, %v1110
        %v1112 = vmul.f32 %v1107, %v1111
        %vm1113 = vweird.f32 %v1046
        %vm1114 = vweird.f32 %v1107
        %vm1115 = vmor %vm1113, %vm1114
        %v1116 = vsel %vm1115, %v1107, %v1112
        %v1117 = vrsqrt.pop %v1047
        %v1118 = vmul.f32 %v1117, %v1047
        %v1119 = vmul.f32 %v1118, %v1117
        %v1120 = vmul.f32 0.5, %v1119
        %v1121 = vsub.f32 1.5, %v1120
        %v1122 = vmul.f32 %v1117, %v1121
        %vm1123 = vweird.f32 %v1047
        %vm1124 = vweird.f32 %v1117
        %vm1125 = vmor %vm1123, %vm1124
        %v1126 = vsel %vm1125, %v1117, %v1122
        %v1127 = vrsqrt.pop %v1048
        %v1128 = vmul.f32 %v1127, %v1048
        %v1129 = vmul.f32 %v1128, %v1127
        %v1130 = vmul.f32 0.5, %v1129
        %v1131 = vsub.f32 1.5, %v1130
        %v1132 = vmul.f32 %v1127, %v1131
        %vm1133 = vweird.f32 %v1048
        %vm1134 = vweird.f32 %v1127
        %vm1135 = vmor %vm1133, %vm1134
        %v1136 = vsel %vm1135, %v1127, %v1132
        %v1137 = vrsqrt.pop %v1049
        %v1138 = vmul.f32 %v1137, %v1049
        %v1139 = vmul.f32 %v1138, %v1137
        %v1140 = vmul.f32 0.5, %v1139
        %v1141 = vsub.f32 1.5, %v1140
        %v1142 = vmul.f32 %v1137, %v1141
        %vm1143 = vweird.f32 %v1049
        %vm1144 = vweird.f32 %v1137
        %vm1145 = vmor %vm1143, %vm1144
        %v1146 = vsel %vm1145, %v1137, %v1142
        %v1147 = vrsqrt.pop %v1050
        %v1148 = vmul.f32 %v1147, %v1050
        %v1149 = vmul.f32 %v1148, %v1147
        %v1150 = vmul.f32 0.5, %v1149
        %v1151 = vsub.f32 1.5, %v1150
        %v1152 = vmul.f32 %v1147, %v1151
        %vm1153 = vweird.f32 %v1050
        %vm1154 = vweird.f32 %v1147
        %vm1155 = vmor %vm1153, %vm1154
        %v1156 = vsel %vm1155, %v1147, %v1152
        %v1157 = vrsqrt.pop %v1051
        %v1158 = vmul.f32 %v1157, %v1051
        %v1159 = vmul.f32 %v1158, %v1157
        %v1160 = vmul.f32 0.5, %v1159
        %v1161 = vsub.f32 1.5, %v1160
        %v1162 = vmul.f32 %v1157, %v1161
        %vm1163 = vweird.f32 %v1051
        %vm1164 = vweird.f32 %v1157
        %vm1165 = vmor %vm1163, %vm1164
        %v1166 = vsel %vm1165, %v1157, %v1162
        %v1167 = vrsqrt.pop %v1052
        %v1168 = vmul.f32 %v1167, %v1052
        %v1169 = vmul.f32 %v1168, %v1167
        %v1170 = vmul.f32 0.5, %v1169
        %v1171 = vsub.f32 1.5, %v1170
        %v1172 = vmul.f32 %v1167, %v1171
        %vm1173 = vweird.f32 %v1052
        %vm1174 = vweird.f32 %v1167
        %vm1175 = vmor %vm1173, %vm1174
        %v1176 = vsel %vm1175, %v1167, %v1172
        %v1177 = vrsqrt.pop %v1053
        %v1178 = vmul.f32 %v1177, %v1053
        %v1179 = vmul.f32 %v1178, %v1177
        %v1180 = vmul.f32 0.5, %v1179
        %v1181 = vsub.f32 1.5, %v1180
        %v1182 = vmul.f32 %v1177, %v1181
        %vm1183 = vweird.f32 %v1053
        %vm1184 = vweird.f32 %v1177
        %vm1185 = vmor %vm1183, %vm1184
        %v1186 = vsel %vm1185, %v1177, %v1182
        %v1187 = vrsqrt.pop %v1054
        %v1188 = vmul.f32 %v1187, %v1054
        %v1189 = vmul.f32 %v1188, %v1187
        %v1190 = vmul.f32 0.5, %v1189
        %v1191 = vsub.f32 1.5, %v1190
        %v1192 = vmul.f32 %v1187, %v1191
        %vm1193 = vweird.f32 %v1054
        %vm1194 = vweird.f32 %v1187
        %vm1195 = vmor %vm1193, %vm1194
        %v1196 = vsel %vm1195, %v1187, %v1192
        %v1197 = vrsqrt.pop %v1055
        %v1198 = vmul.f32 %v1197, %v1055
        %v1199 = vmul.f32 %v1198, %v1197
        %v1200 = vmul.f32 0.5, %v1199
        %v1201 = vsub.f32 1.5, %v1200
        %v1202 = vmul.f32 %v1197, %v1201
        %vm1203 = vweird.f32 %v1055
        %vm1204 = vweird.f32 %v1197
        %vm1205 = vmor %vm1203, %vm1204
        %v1206 = vsel %vm1205, %v1197, %v1202
        %v1207 = vrsqrt.pop %v1056
        %v1208 = vmul.f32 %v1207, %v1056
        %v1209 = vmul.f32 %v1208, %v1207
        %v1210 = vmul.f32 0.5, %v1209
        %v1211 = vsub.f32 1.5, %v1210
        %v1212 = vmul.f32 %v1207, %v1211
        %vm1213 = vweird.f32 %v1056
        %vm1214 = vweird.f32 %v1207
        %vm1215 = vmor %vm1213, %vm1214
        %v1216 = vsel %vm1215, %v1207, %v1212
        %v1217 = vmul.f32 %v1025, %v1066
        %v1218 = vmul.f32 %v1026, %v1076
        %v1219 = vmul.f32 %v1027, %v1086
        %v1220 = vmul.f32 %v1028, %v1096
        %v1221 = vmul.f32 %v1029, %v1106
        %v1222 = vmul.f32 %v1030, %v1116
        %v1223 = vmul.f32 %v1031, %v1126
        %v1224 = vmul.f32 %v1032, %v1136
        %v1225 = vmul.f32 %v1033, %v1146
        %v1226 = vmul.f32 %v1034, %v1156
        %v1227 = vmul.f32 %v1035, %v1166
        %v1228 = vmul.f32 %v1036, %v1176
        %v1229 = vmul.f32 %v1037, %v1186
        %v1230 = vmul.f32 %v1038, %v1196
        %v1231 = vmul.f32 %v1039, %v1206
        %v1232 = vmul.f32 %v1040, %v1216
        %v1234 = vperm.slane %v464, 0
        %v1236 = vmul.f32 %v1217, %v1234
        %v1237 = vmul.f32 %v1218, %v1234
        %v1238 = vmul.f32 %v1219, %v1234
        %v1239 = vmul.f32 %v1220, %v1234
        %v1240 = vmul.f32 %v1221, %v1234
        %v1241 = vmul.f32 %v1222, %v1234
        %v1242 = vmul.f32 %v1223, %v1234
        %v1243 = vmul.f32 %v1224, %v1234
        %v1244 = vmul.f32 %v1225, %v1234
        %v1245 = vmul.f32 %v1226, %v1234
        %v1246 = vmul.f32 %v1227, %v1234
        %v1247 = vmul.f32 %v1228, %v1234
        %v1248 = vmul.f32 %v1229, %v1234
        %v1249 = vmul.f32 %v1230, %v1234
        %v1250 = vmul.f32 %v1231, %v1234
        %v1251 = vmul.f32 %v1232, %v1234
        %v1253 = vperm.slane %v465, 0
        %v1255 = vadd.f32 %v1236, %v1253
        %v1256 = vadd.f32 %v1237, %v1253
        %v1257 = vadd.f32 %v1238, %v1253
        %v1258 = vadd.f32 %v1239, %v1253
        %v1259 = vadd.f32 %v1240, %v1253
        %v1260 = vadd.f32 %v1241, %v1253
        %v1261 = vadd.f32 %v1242, %v1253
        %v1262 = vadd.f32 %v1243, %v1253
        %v1263 = vadd.f32 %v1244, %v1253
        %v1264 = vadd.f32 %v1245, %v1253
        %v1265 = vadd.f32 %v1246, %v1253
        %v1266 = vadd.f32 %v1247, %v1253
        %v1267 = vadd.f32 %v1248, %v1253
        %v1268 = vadd.f32 %v1249, %v1253
        %v1269 = vadd.f32 %v1250, %v1253
        %v1270 = vadd.f32 %v1251, %v1253
        %v1271 = vpack.c.bf16 %v1256, %v1255
        %v1272 = vpack.c.bf16 %v1258, %v1257
        %v1273 = vpack.c.bf16 %v1260, %v1259
        %v1274 = vpack.c.bf16 %v1262, %v1261
        %v1275 = vpack.c.bf16 %v1264, %v1263
        %v1276 = vpack.c.bf16 %v1266, %v1265
        %v1277 = vpack.c.bf16 %v1268, %v1267
        %v1278 = vpack.c.bf16 %v1270, %v1269
        %v1279 = vld [vmem:[#allocation11] sm:$0xff]
        %v1280 = vld [vmem:[#allocation11 + $0x8] sm:$0xff]
        %v1281 = vld [vmem:[#allocation11 + $0x10] sm:$0xff]
        %v1282 = vld [vmem:[#allocation11 + $0x18] sm:$0xff]
        %v1283 = vld [vmem:[#allocation11 + $0x20] sm:$0xff]
        %v1284 = vld [vmem:[#allocation11 + $0x28] sm:$0xff]
        %v1285 = vld [vmem:[#allocation11 + $0x30] sm:$0xff]
        %v1286 = vld [vmem:[#allocation11 + $0x38] sm:$0xff]
        %v1287 = vld [vmem:[#allocation11 + $0x40] sm:$0xff]
        %v1288 = vld [vmem:[#allocation11 + $0x48] sm:$0xff]
        %v1289 = vld [vmem:[#allocation11 + $0x50] sm:$0xff]
        %v1290 = vld [vmem:[#allocation11 + $0x58] sm:$0xff]
        %v1291 = vld [vmem:[#allocation11 + $0x60] sm:$0xff]
        %v1292 = vld [vmem:[#allocation11 + $0x68] sm:$0xff]
        %v1293 = vld [vmem:[#allocation11 + $0x70] sm:$0xff]
        %v1294 = vld [vmem:[#allocation11 + $0x78] sm:$0xff]
        %v1296 = vperm.slane %v466, 0
        %v1297 = vperm.slane %v466, 1
        %v1316 = vunpack.c.l.b16 %v1279
        %v1317 = vunpack.c.h.b16 %v1279
        %v1318 = vunpack.c.l.b16 %v1280
        %v1319 = vunpack.c.h.b16 %v1280
        %v1320 = vunpack.c.l.b16 %v1281
        %v1321 = vunpack.c.h.b16 %v1281
        %v1322 = vunpack.c.l.b16 %v1282
        %v1323 = vunpack.c.h.b16 %v1282
        %v1324 = vunpack.c.l.b16 %v1283
        %v1325 = vunpack.c.h.b16 %v1283
        %v1326 = vunpack.c.l.b16 %v1284
        %v1327 = vunpack.c.h.b16 %v1284
        %v1328 = vunpack.c.l.b16 %v1285
        %v1329 = vunpack.c.h.b16 %v1285
        %v1330 = vunpack.c.l.b16 %v1286
        %v1331 = vunpack.c.h.b16 %v1286
        %v1332 = vunpack.c.l.b16 %v1287
        %v1333 = vunpack.c.h.b16 %v1287
        %v1334 = vunpack.c.l.b16 %v1288
        %v1335 = vunpack.c.h.b16 %v1288
        %v1336 = vunpack.c.l.b16 %v1289
        %v1337 = vunpack.c.h.b16 %v1289
        %v1338 = vunpack.c.l.b16 %v1290
        %v1339 = vunpack.c.h.b16 %v1290
        %v1340 = vunpack.c.l.b16 %v1291
        %v1341 = vunpack.c.h.b16 %v1291
        %v1342 = vunpack.c.l.b16 %v1292
        %v1343 = vunpack.c.h.b16 %v1292
        %v1344 = vunpack.c.l.b16 %v1293
        %v1345 = vunpack.c.h.b16 %v1293
        %v1346 = vunpack.c.l.b16 %v1294
        %v1347 = vunpack.c.h.b16 %v1294
        %v1348 = vpack.c.b16 %v1318, %v1316
        %v1349 = vpack.c.b16 %v1319, %v1317
        %v1350 = vpack.c.b16 %v1322, %v1320
        %v1351 = vpack.c.b16 %v1323, %v1321
        %v1352 = vpack.c.b16 %v1326, %v1324
        %v1353 = vpack.c.b16 %v1327, %v1325
        %v1354 = vpack.c.b16 %v1330, %v1328
        %v1355 = vpack.c.b16 %v1331, %v1329
        %v1356 = vpack.c.b16 %v1334, %v1332
        %v1357 = vpack.c.b16 %v1335, %v1333
        %v1358 = vpack.c.b16 %v1338, %v1336
        %v1359 = vpack.c.b16 %v1339, %v1337
        %v1360 = vpack.c.b16 %v1342, %v1340
        %v1361 = vpack.c.b16 %v1343, %v1341
        %v1362 = vpack.c.b16 %v1346, %v1344
        %v1363 = vpack.c.b16 %v1347, %v1345
        %1380 = vmatpush.bf16.msra.mxu0 %v1362
        %1381 = vmatpush.bf16.msra.mxu0 %v1360
        %1382 = vmatpush.bf16.msra.mxu0 %v1358
        %1383 = vmatpush.bf16.msra.mxu0 %v1356
        %1384 = vmatpush.bf16.msra.mxu0 %v1354
        %1385 = vmatpush.bf16.msra.mxu0 %v1352
        %1386 = vmatpush.bf16.msra.mxu0 %v1350
        %1387 = vmatpush.bf16.msra.mxu0 %v1348
        %1388 = vmatmul.bf16.gmra.mxu0 %v1271
        %v1389 = vpop.f32.mrf.mxu0
        %v1390 = vadd.f32 %v1296, %v1389
        %v1391 = vpop.f32.mrf.mxu0
        %v1392 = vadd.f32 %v1296, %v1391
        %1393 = vmatmul.bf16.gmra.mxu0 %v1272
        %v1394 = vpop.f32.mrf.mxu0
        %v1395 = vadd.f32 %v1296, %v1394
        %v1396 = vpop.f32.mrf.mxu0
        %v1397 = vadd.f32 %v1296, %v1396
        %1398 = vmatmul.bf16.gmra.mxu0 %v1273
        %v1399 = vpop.f32.mrf.mxu0
        %v1400 = vadd.f32 %v1296, %v1399
        %v1401 = vpop.f32.mrf.mxu0
        %v1402 = vadd.f32 %v1296, %v1401
        %1403 = vmatmul.bf16.gmra.mxu0 %v1274
        %v1404 = vpop.f32.mrf.mxu0
        %v1405 = vadd.f32 %v1296, %v1404
        %v1406 = vpop.f32.mrf.mxu0
        %v1407 = vadd.f32 %v1296, %v1406
        %1408 = vmatmul.bf16.gmra.mxu0 %v1275
        %v1409 = vpop.f32.mrf.mxu0
        %v1410 = vadd.f32 %v1296, %v1409
        %v1411 = vpop.f32.mrf.mxu0
        %v1412 = vadd.f32 %v1296, %v1411
        %1413 = vmatmul.bf16.gmra.mxu0 %v1276
        %v1414 = vpop.f32.mrf.mxu0
        %v1415 = vadd.f32 %v1296, %v1414
        %v1416 = vpop.f32.mrf.mxu0
        %v1417 = vadd.f32 %v1296, %v1416
        %1418 = vmatmul.bf16.gmra.mxu0 %v1277
        %v1419 = vpop.f32.mrf.mxu0
        %v1420 = vadd.f32 %v1296, %v1419
        %v1421 = vpop.f32.mrf.mxu0
        %v1422 = vadd.f32 %v1296, %v1421
        %1423 = vmatmul.bf16.gmra.mxu0 %v1278
        %v1424 = vpop.f32.mrf.mxu0
        %v1425 = vadd.f32 %v1296, %v1424
        %v1426 = vpop.f32.mrf.mxu0
        %v1427 = vadd.f32 %v1296, %v1426
        %1428 = vdwg.mxu0
        %1429 = vmatpush.bf16.msra.mxu0 %v1363
        %1430 = vmatpush.bf16.msra.mxu0 %v1361
        %1431 = vmatpush.bf16.msra.mxu0 %v1359
        %1432 = vmatpush.bf16.msra.mxu0 %v1357
        %1433 = vmatpush.bf16.msra.mxu0 %v1355
        %1434 = vmatpush.bf16.msra.mxu0 %v1353
        %1435 = vmatpush.bf16.msra.mxu0 %v1351
        %1436 = vmatpush.bf16.msra.mxu0 %v1349
        %1437 = vmatmul.bf16.gmra.mxu0 %v1271
        %v1438 = vpop.f32.mrf.mxu0
        %v1439 = vadd.f32 %v1297, %v1438
        %v1440 = vpop.f32.mrf.mxu0
        %v1441 = vadd.f32 %v1297, %v1440
        %1442 = vmatmul.bf16.gmra.mxu0 %v1272
        %v1443 = vpop.f32.mrf.mxu0
        %v1444 = vadd.f32 %v1297, %v1443
        %v1445 = vpop.f32.mrf.mxu0
        %v1446 = vadd.f32 %v1297, %v1445
        %1447 = vmatmul.bf16.gmra.mxu0 %v1273
        %v1448 = vpop.f32.mrf.mxu0
        %v1449 = vadd.f32 %v1297, %v1448
        %v1450 = vpop.f32.mrf.mxu0
        %v1451 = vadd.f32 %v1297, %v1450
        %1452 = vmatmul.bf16.gmra.mxu0 %v1274
        %v1453 = vpop.f32.mrf.mxu0
        %v1454 = vadd.f32 %v1297, %v1453
        %v1455 = vpop.f32.mrf.mxu0
        %v1456 = vadd.f32 %v1297, %v1455
        %1457 = vmatmul.bf16.gmra.mxu0 %v1275
        %v1458 = vpop.f32.mrf.mxu0
        %v1459 = vadd.f32 %v1297, %v1458
        %v1460 = vpop.f32.mrf.mxu0
        %v1461 = vadd.f32 %v1297, %v1460
        %1462 = vmatmul.bf16.gmra.mxu0 %v1276
        %v1463 = vpop.f32.mrf.mxu0
        %v1464 = vadd.f32 %v1297, %v1463
        %v1465 = vpop.f32.mrf.mxu0
        %v1466 = vadd.f32 %v1297, %v1465
        %1467 = vmatmul.bf16.gmra.mxu0 %v1277
        %v1468 = vpop.f32.mrf.mxu0
        %v1469 = vadd.f32 %v1297, %v1468
        %v1470 = vpop.f32.mrf.mxu0
        %v1471 = vadd.f32 %v1297, %v1470
        %1472 = vmatmul.bf16.gmra.mxu0 %v1278
        %v1473 = vpop.f32.mrf.mxu0
        %v1474 = vadd.f32 %v1297, %v1473
        %v1475 = vpop.f32.mrf.mxu0
        %v1476 = vadd.f32 %v1297, %v1475
        %1477 = vdwg.mxu0
        %v1478 = vmax.f32 %v1390, 0.0
        %v1479 = vmax.f32 %v1439, 0.0
        %v1480 = vmax.f32 %v1392, 0.0
        %v1481 = vmax.f32 %v1441, 0.0
        %v1482 = vmax.f32 %v1395, 0.0
        %v1483 = vmax.f32 %v1444, 0.0
        %v1484 = vmax.f32 %v1397, 0.0
        %v1485 = vmax.f32 %v1446, 0.0
        %v1486 = vmax.f32 %v1400, 0.0
        %v1487 = vmax.f32 %v1449, 0.0
        %v1488 = vmax.f32 %v1402, 0.0
        %v1489 = vmax.f32 %v1451, 0.0
        %v1490 = vmax.f32 %v1405, 0.0
        %v1491 = vmax.f32 %v1454, 0.0
        %v1492 = vmax.f32 %v1407, 0.0
        %v1493 = vmax.f32 %v1456, 0.0
        %v1494 = vmax.f32 %v1410, 0.0
        %v1495 = vmax.f32 %v1459, 0.0
        %v1496 = vmax.f32 %v1412, 0.0
        %v1497 = vmax.f32 %v1461, 0.0
        %v1498 = vmax.f32 %v1415, 0.0
        %v1499 = vmax.f32 %v1464, 0.0
        %v1500 = vmax.f32 %v1417, 0.0
        %v1501 = vmax.f32 %v1466, 0.0
        %v1502 = vmax.f32 %v1420, 0.0
        %v1503 = vmax.f32 %v1469, 0.0
        %v1504 = vmax.f32 %v1422, 0.0
        %v1505 = vmax.f32 %v1471, 0.0
        %v1506 = vmax.f32 %v1425, 0.0
        %v1507 = vmax.f32 %v1474, 0.0
        %v1508 = vmax.f32 %v1427, 0.0
        %v1509 = vmax.f32 %v1476, 0.0
        %v1510 = vpack.c.bf16 %v1480, %v1478
        %v1511 = vpack.c.bf16 %v1481, %v1479
        %v1512 = vpack.c.bf16 %v1484, %v1482
        %v1513 = vpack.c.bf16 %v1485, %v1483
        %v1514 = vpack.c.bf16 %v1488, %v1486
        %v1515 = vpack.c.bf16 %v1489, %v1487
        %v1516 = vpack.c.bf16 %v1492, %v1490
        %v1517 = vpack.c.bf16 %v1493, %v1491
        %v1518 = vpack.c.bf16 %v1496, %v1494
        %v1519 = vpack.c.bf16 %v1497, %v1495
        %v1520 = vpack.c.bf16 %v1500, %v1498
        %v1521 = vpack.c.bf16 %v1501, %v1499
        %v1522 = vpack.c.bf16 %v1504, %v1502
        %v1523 = vpack.c.bf16 %v1505, %v1503
        %v1524 = vpack.c.bf16 %v1508, %v1506
        %v1525 = vpack.c.bf16 %v1509, %v1507
        %v1526 = vld [vmem:[#allocation13] sm:$0xff]
        %v1527 = vld [vmem:[#allocation13 + $0x8] sm:$0xff]
        %v1528 = vld [vmem:[#allocation13 + $0x10] sm:$0xff]
        %v1529 = vld [vmem:[#allocation13 + $0x18] sm:$0xff]
        %v1530 = vld [vmem:[#allocation13 + $0x20] sm:$0xff]
        %v1531 = vld [vmem:[#allocation13 + $0x28] sm:$0xff]
        %v1532 = vld [vmem:[#allocation13 + $0x30] sm:$0xff]
        %v1533 = vld [vmem:[#allocation13 + $0x38] sm:$0xff]
        %v1534 = vld [vmem:[#allocation13 + $0x40] sm:$0xff]
        %v1535 = vld [vmem:[#allocation13 + $0x48] sm:$0xff]
        %v1536 = vld [vmem:[#allocation13 + $0x50] sm:$0xff]
        %v1537 = vld [vmem:[#allocation13 + $0x58] sm:$0xff]
        %v1538 = vld [vmem:[#allocation13 + $0x60] sm:$0xff]
        %v1539 = vld [vmem:[#allocation13 + $0x68] sm:$0xff]
        %v1540 = vld [vmem:[#allocation13 + $0x70] sm:$0xff]
        %v1541 = vld [vmem:[#allocation13 + $0x78] sm:$0xff]
        %v1542 = vld [vmem:[#allocation13 + $0x80] sm:$0xff]
        %v1543 = vld [vmem:[#allocation13 + $0x88] sm:$0xff]
        %v1544 = vld [vmem:[#allocation13 + $0x90] sm:$0xff]
        %v1545 = vld [vmem:[#allocation13 + $0x98] sm:$0xff]
        %v1546 = vld [vmem:[#allocation13 + $0xa0] sm:$0xff]
        %v1547 = vld [vmem:[#allocation13 + $0xa8] sm:$0xff]
        %v1548 = vld [vmem:[#allocation13 + $0xb0] sm:$0xff]
        %v1549 = vld [vmem:[#allocation13 + $0xb8] sm:$0xff]
        %v1550 = vld [vmem:[#allocation13 + $0xc0] sm:$0xff]
        %v1551 = vld [vmem:[#allocation13 + $0xc8] sm:$0xff]
        %v1552 = vld [vmem:[#allocation13 + $0xd0] sm:$0xff]
        %v1553 = vld [vmem:[#allocation13 + $0xd8] sm:$0xff]
        %v1554 = vld [vmem:[#allocation13 + $0xe0] sm:$0xff]
        %v1555 = vld [vmem:[#allocation13 + $0xe8] sm:$0xff]
        %v1556 = vld [vmem:[#allocation13 + $0xf0] sm:$0xff]
        %v1557 = vld [vmem:[#allocation13 + $0xf8] sm:$0xff]
        %v1559 = vperm.slane %v467, 0
        %v1560 = vperm.slane %v467, 1
        %v1595 = vunpack.c.l.b16 %v1526
        %v1596 = vunpack.c.h.b16 %v1526
        %v1597 = vunpack.c.l.b16 %v1527
        %v1598 = vunpack.c.h.b16 %v1527
        %v1599 = vunpack.c.l.b16 %v1528
        %v1600 = vunpack.c.h.b16 %v1528
        %v1601 = vunpack.c.l.b16 %v1529
        %v1602 = vunpack.c.h.b16 %v1529
        %v1603 = vunpack.c.l.b16 %v1530
        %v1604 = vunpack.c.h.b16 %v1530
        %v1605 = vunpack.c.l.b16 %v1531
        %v1606 = vunpack.c.h.b16 %v1531
        %v1607 = vunpack.c.l.b16 %v1532
        %v1608 = vunpack.c.h.b16 %v1532
        %v1609 = vunpack.c.l.b16 %v1533
        %v1610 = vunpack.c.h.b16 %v1533
        %v1611 = vunpack.c.l.b16 %v1534
        %v1612 = vunpack.c.h.b16 %v1534
        %v1613 = vunpack.c.l.b16 %v1535
        %v1614 = vunpack.c.h.b16 %v1535
        %v1615 = vunpack.c.l.b16 %v1536
        %v1616 = vunpack.c.h.b16 %v1536
        %v1617 = vunpack.c.l.b16 %v1537
        %v1618 = vunpack.c.h.b16 %v1537
        %v1619 = vunpack.c.l.b16 %v1538
        %v1620 = vunpack.c.h.b16 %v1538
        %v1621 = vunpack.c.l.b16 %v1539
        %v1622 = vunpack.c.h.b16 %v1539
        %v1623 = vunpack.c.l.b16 %v1540
        %v1624 = vunpack.c.h.b16 %v1540
        %v1625 = vunpack.c.l.b16 %v1541
        %v1626 = vunpack.c.h.b16 %v1541
        %v1627 = vunpack.c.l.b16 %v1542
        %v1628 = vunpack.c.h.b16 %v1542
        %v1629 = vunpack.c.l.b16 %v1543
        %v1630 = vunpack.c.h.b16 %v1543
        %v1631 = vunpack.c.l.b16 %v1544
        %v1632 = vunpack.c.h.b16 %v1544
        %v1633 = vunpack.c.l.b16 %v1545
        %v1634 = vunpack.c.h.b16 %v1545
        %v1635 = vunpack.c.l.b16 %v1546
        %v1636 = vunpack.c.h.b16 %v1546
        %v1637 = vunpack.c.l.b16 %v1547
        %v1638 = vunpack.c.h.b16 %v1547
        %v1639 = vunpack.c.l.b16 %v1548
        %v1640 = vunpack.c.h.b16 %v1548
        %v1641 = vunpack.c.l.b16 %v1549
        %v1642 = vunpack.c.h.b16 %v1549
        %v1643 = vunpack.c.l.b16 %v1550
        %v1644 = vunpack.c.h.b16 %v1550
        %v1645 = vunpack.c.l.b16 %v1551
        %v1646 = vunpack.c.h.b16 %v1551
        %v1647 = vunpack.c.l.b16 %v1552
        %v1648 = vunpack.c.h.b16 %v1552
        %v1649 = vunpack.c.l.b16 %v1553
        %v1650 = vunpack.c.h.b16 %v1553
        %v1651 = vunpack.c.l.b16 %v1554
        %v1652 = vunpack.c.h.b16 %v1554
        %v1653 = vunpack.c.l.b16 %v1555
        %v1654 = vunpack.c.h.b16 %v1555
        %v1655 = vunpack.c.l.b16 %v1556
        %v1656 = vunpack.c.h.b16 %v1556
        %v1657 = vunpack.c.l.b16 %v1557
        %v1658 = vunpack.c.h.b16 %v1557
        %v1659 = vpack.c.b16 %v1597, %v1595
        %v1660 = vpack.c.b16 %v1598, %v1596
        %v1661 = vpack.c.b16 %v1601, %v1599
        %v1662 = vpack.c.b16 %v1602, %v1600
        %v1663 = vpack.c.b16 %v1605, %v1603
        %v1664 = vpack.c.b16 %v1606, %v1604
        %v1665 = vpack.c.b16 %v1609, %v1607
        %v1666 = vpack.c.b16 %v1610, %v1608
        %v1667 = vpack.c.b16 %v1613, %v1611
        %v1668 = vpack.c.b16 %v1614, %v1612
        %v1669 = vpack.c.b16 %v1617, %v1615
        %v1670 = vpack.c.b16 %v1618, %v1616
        %v1671 = vpack.c.b16 %v1621, %v1619
        %v1672 = vpack.c.b16 %v1622, %v1620
        %v1673 = vpack.c.b16 %v1625, %v1623
        %v1674 = vpack.c.b16 %v1626, %v1624
        %v1675 = vpack.c.b16 %v1629, %v1627
        %v1676 = vpack.c.b16 %v1630, %v1628
        %v1677 = vpack.c.b16 %v1633, %v1631
        %v1678 = vpack.c.b16 %v1634, %v1632
        %v1679 = vpack.c.b16 %v1637, %v1635
        %v1680 = vpack.c.b16 %v1638, %v1636
        %v1681 = vpack.c.b16 %v1641, %v1639
        %v1682 = vpack.c.b16 %v1642, %v1640
        %v1683 = vpack.c.b16 %v1645, %v1643
        %v1684 = vpack.c.b16 %v1646, %v1644
        %v1685 = vpack.c.b16 %v1649, %v1647
        %v1686 = vpack.c.b16 %v1650, %v1648
        %v1687 = vpack.c.b16 %v1653, %v1651
        %v1688 = vpack.c.b16 %v1654, %v1652
        %v1689 = vpack.c.b16 %v1657, %v1655
        %v1690 = vpack.c.b16 %v1658, %v1656
        %1723 = vmatpush.bf16.msra.mxu0 %v1673
        %1724 = vmatpush.bf16.msra.mxu0 %v1671
        %1725 = vmatpush.bf16.msra.mxu0 %v1669
        %1726 = vmatpush.bf16.msra.mxu0 %v1667
        %1727 = vmatpush.bf16.msra.mxu0 %v1665
        %1728 = vmatpush.bf16.msra.mxu0 %v1663
        %1729 = vmatpush.bf16.msra.mxu0 %v1661
        %1730 = vmatpush.bf16.msra.mxu0 %v1659
        %1731 = vmatmul.bf16.gmra.mxu0 %v1510
        %v1732 = vpop.f32.mrf.mxu0
        %v1733 = vadd.f32 %v1559, %v1732
        %v1734 = vpop.f32.mrf.mxu0
        %v1735 = vadd.f32 %v1559, %v1734
        %1736 = vmatmul.bf16.gmra.mxu0 %v1512
        %v1737 = vpop.f32.mrf.mxu0
        %v1738 = vadd.f32 %v1559, %v1737
        %v1739 = vpop.f32.mrf.mxu0
        %v1740 = vadd.f32 %v1559, %v1739
        %1741 = vmatmul.bf16.gmra.mxu0 %v1514
        %v1742 = vpop.f32.mrf.mxu0
        %v1743 = vadd.f32 %v1559, %v1742
        %v1744 = vpop.f32.mrf.mxu0
        %v1745 = vadd.f32 %v1559, %v1744
        %1746 = vmatmul.bf16.gmra.mxu0 %v1516
        %v1747 = vpop.f32.mrf.mxu0
        %v1748 = vadd.f32 %v1559, %v1747
        %v1749 = vpop.f32.mrf.mxu0
        %v1750 = vadd.f32 %v1559, %v1749
        %1751 = vmatmul.bf16.gmra.mxu0 %v1518
        %v1752 = vpop.f32.mrf.mxu0
        %v1753 = vadd.f32 %v1559, %v1752
        %v1754 = vpop.f32.mrf.mxu0
        %v1755 = vadd.f32 %v1559, %v1754
        %1756 = vmatmul.bf16.gmra.mxu0 %v1520
        %v1757 = vpop.f32.mrf.mxu0
        %v1758 = vadd.f32 %v1559, %v1757
        %v1759 = vpop.f32.mrf.mxu0
        %v1760 = vadd.f32 %v1559, %v1759
        %1761 = vmatmul.bf16.gmra.mxu0 %v1522
        %v1762 = vpop.f32.mrf.mxu0
        %v1763 = vadd.f32 %v1559, %v1762
        %v1764 = vpop.f32.mrf.mxu0
        %v1765 = vadd.f32 %v1559, %v1764
        %1766 = vmatmul.bf16.gmra.mxu0 %v1524
        %v1767 = vpop.f32.mrf.mxu0
        %v1768 = vadd.f32 %v1559, %v1767
        %v1769 = vpop.f32.mrf.mxu0
        %v1770 = vadd.f32 %v1559, %v1769
        %1771 = vdwg.mxu0
        %1772 = vmatpush.bf16.msra.mxu0 %v1689
        %1773 = vmatpush.bf16.msra.mxu0 %v1687
        %1774 = vmatpush.bf16.msra.mxu0 %v1685
        %1775 = vmatpush.bf16.msra.mxu0 %v1683
        %1776 = vmatpush.bf16.msra.mxu0 %v1681
        %1777 = vmatpush.bf16.msra.mxu0 %v1679
        %1778 = vmatpush.bf16.msra.mxu0 %v1677
        %1779 = vmatpush.bf16.msra.mxu0 %v1675
        %1780 = vmatmul.bf16.gmra.mxu0 %v1511
        %v1781 = vpop.f32.mrf.mxu0
        %v1782 = vadd.f32 %v1733, %v1781
        %v1783 = vpop.f32.mrf.mxu0
        %v1784 = vadd.f32 %v1735, %v1783
        %1785 = vmatmul.bf16.gmra.mxu0 %v1513
        %v1786 = vpop.f32.mrf.mxu0
        %v1787 = vadd.f32 %v1738, %v1786
        %v1788 = vpop.f32.mrf.mxu0
        %v1789 = vadd.f32 %v1740, %v1788
        %1790 = vmatmul.bf16.gmra.mxu0 %v1515
        %v1791 = vpop.f32.mrf.mxu0
        %v1792 = vadd.f32 %v1743, %v1791
        %v1793 = vpop.f32.mrf.mxu0
        %v1794 = vadd.f32 %v1745, %v1793
        %1795 = vmatmul.bf16.gmra.mxu0 %v1517
        %v1796 = vpop.f32.mrf.mxu0
        %v1797 = vadd.f32 %v1748, %v1796
        %v1798 = vpop.f32.mrf.mxu0
        %v1799 = vadd.f32 %v1750, %v1798
        %1800 = vmatmul.bf16.gmra.mxu0 %v1519
        %v1801 = vpop.f32.mrf.mxu0
        %v1802 = vadd.f32 %v1753, %v1801
        %v1803 = vpop.f32.mrf.mxu0
        %v1804 = vadd.f32 %v1755, %v1803
        %1805 = vmatmul.bf16.gmra.mxu0 %v1521
        %v1806 = vpop.f32.mrf.mxu0
        %v1807 = vadd.f32 %v1758, %v1806
        %v1808 = vpop.f32.mrf.mxu0
        %v1809 = vadd.f32 %v1760, %v1808
        %1810 = vmatmul.bf16.gmra.mxu0 %v1523
        %v1811 = vpop.f32.mrf.mxu0
        %v1812 = vadd.f32 %v1763, %v1811
        %v1813 = vpop.f32.mrf.mxu0
        %v1814 = vadd.f32 %v1765, %v1813
        %1815 = vmatmul.bf16.gmra.mxu0 %v1525
        %v1816 = vpop.f32.mrf.mxu0
        %v1817 = vadd.f32 %v1768, %v1816
        %v1818 = vpop.f32.mrf.mxu0
        %v1819 = vadd.f32 %v1770, %v1818
        %1820 = vdwg.mxu0
        %1821 = vmatpush.bf16.msra.mxu0 %v1674
        %1822 = vmatpush.bf16.msra.mxu0 %v1672
        %1823 = vmatpush.bf16.msra.mxu0 %v1670
        %1824 = vmatpush.bf16.msra.mxu0 %v1668
        %1825 = vmatpush.bf16.msra.mxu0 %v1666
        %1826 = vmatpush.bf16.msra.mxu0 %v1664
        %1827 = vmatpush.bf16.msra.mxu0 %v1662
        %1828 = vmatpush.bf16.msra.mxu0 %v1660
        %1829 = vmatmul.bf16.gmra.mxu0 %v1510
        %v1830 = vpop.f32.mrf.mxu0
        %v1831 = vadd.f32 %v1560, %v1830
        %v1832 = vpop.f32.mrf.mxu0
        %v1833 = vadd.f32 %v1560, %v1832
        %1834 = vmatmul.bf16.gmra.mxu0 %v1512
        %v1835 = vpop.f32.mrf.mxu0
        %v1836 = vadd.f32 %v1560, %v1835
        %v1837 = vpop.f32.mrf.mxu0
        %v1838 = vadd.f32 %v1560, %v1837
        %1839 = vmatmul.bf16.gmra.mxu0 %v1514
        %v1840 = vpop.f32.mrf.mxu0
        %v1841 = vadd.f32 %v1560, %v1840
        %v1842 = vpop.f32.mrf.mxu0
        %v1843 = vadd.f32 %v1560, %v1842
        %1844 = vmatmul.bf16.gmra.mxu0 %v1516
        %v1845 = vpop.f32.mrf.mxu0
        %v1846 = vadd.f32 %v1560, %v1845
        %v1847 = vpop.f32.mrf.mxu0
        %v1848 = vadd.f32 %v1560, %v1847
        %1849 = vmatmul.bf16.gmra.mxu0 %v1518
        %v1850 = vpop.f32.mrf.mxu0
        %v1851 = vadd.f32 %v1560, %v1850
        %v1852 = vpop.f32.mrf.mxu0
        %v1853 = vadd.f32 %v1560, %v1852
        %1854 = vmatmul.bf16.gmra.mxu0 %v1520
        %v1855 = vpop.f32.mrf.mxu0
        %v1856 = vadd.f32 %v1560, %v1855
        %v1857 = vpop.f32.mrf.mxu0
        %v1858 = vadd.f32 %v1560, %v1857
        %1859 = vmatmul.bf16.gmra.mxu0 %v1522
        %v1860 = vpop.f32.mrf.mxu0
        %v1861 = vadd.f32 %v1560, %v1860
        %v1862 = vpop.f32.mrf.mxu0
        %v1863 = vadd.f32 %v1560, %v1862
        %1864 = vmatmul.bf16.gmra.mxu0 %v1524
        %v1865 = vpop.f32.mrf.mxu0
        %v1866 = vadd.f32 %v1560, %v1865
        %v1867 = vpop.f32.mrf.mxu0
        %v1868 = vadd.f32 %v1560, %v1867
        %1869 = vdwg.mxu0
        %1870 = vmatpush.bf16.msra.mxu0 %v1690
        %1871 = vmatpush.bf16.msra.mxu0 %v1688
        %1872 = vmatpush.bf16.msra.mxu0 %v1686
        %1873 = vmatpush.bf16.msra.mxu0 %v1684
        %1874 = vmatpush.bf16.msra.mxu0 %v1682
        %1875 = vmatpush.bf16.msra.mxu0 %v1680
        %1876 = vmatpush.bf16.msra.mxu0 %v1678
        %1877 = vmatpush.bf16.msra.mxu0 %v1676
        %1878 = vmatmul.bf16.gmra.mxu0 %v1511
        %v1879 = vpop.f32.mrf.mxu0
        %v1880 = vadd.f32 %v1831, %v1879
        %v1881 = vpop.f32.mrf.mxu0
        %v1882 = vadd.f32 %v1833, %v1881
        %1883 = vmatmul.bf16.gmra.mxu0 %v1513
        %v1884 = vpop.f32.mrf.mxu0
        %v1885 = vadd.f32 %v1836, %v1884
        %v1886 = vpop.f32.mrf.mxu0
        %v1887 = vadd.f32 %v1838, %v1886
        %1888 = vmatmul.bf16.gmra.mxu0 %v1515
        %v1889 = vpop.f32.mrf.mxu0
        %v1890 = vadd.f32 %v1841, %v1889
        %v1891 = vpop.f32.mrf.mxu0
        %v1892 = vadd.f32 %v1843, %v1891
        %1893 = vmatmul.bf16.gmra.mxu0 %v1517
        %v1894 = vpop.f32.mrf.mxu0
        %v1895 = vadd.f32 %v1846, %v1894
        %v1896 = vpop.f32.mrf.mxu0
        %v1897 = vadd.f32 %v1848, %v1896
        %1898 = vmatmul.bf16.gmra.mxu0 %v1519
        %v1899 = vpop.f32.mrf.mxu0
        %v1900 = vadd.f32 %v1851, %v1899
        %v1901 = vpop.f32.mrf.mxu0
        %v1902 = vadd.f32 %v1853, %v1901
        %1903 = vmatmul.bf16.gmra.mxu0 %v1521
        %v1904 = vpop.f32.mrf.mxu0
        %v1905 = vadd.f32 %v1856, %v1904
        %v1906 = vpop.f32.mrf.mxu0
        %v1907 = vadd.f32 %v1858, %v1906
        %1908 = vmatmul.bf16.gmra.mxu0 %v1523
        %v1909 = vpop.f32.mrf.mxu0
        %v1910 = vadd.f32 %v1861, %v1909
        %v1911 = vpop.f32.mrf.mxu0
        %v1912 = vadd.f32 %v1863, %v1911
        %1913 = vmatmul.bf16.gmra.mxu0 %v1525
        %v1914 = vpop.f32.mrf.mxu0
        %v1915 = vadd.f32 %v1866, %v1914
        %v1916 = vpop.f32.mrf.mxu0
        %v1917 = vadd.f32 %v1868, %v1916
        %1918 = vdwg.mxu0
        %v1919 = vxor.u32 %v1880, 2147483648
        %v1920 = vxor.u32 %v1882, 2147483648
        %v1921 = vxor.u32 %v1885, 2147483648
        %v1922 = vxor.u32 %v1887, 2147483648
        %v1923 = vxor.u32 %v1890, 2147483648
        %v1924 = vxor.u32 %v1892, 2147483648
        %v1925 = vxor.u32 %v1895, 2147483648
        %v1926 = vxor.u32 %v1897, 2147483648
        %v1927 = vxor.u32 %v1900, 2147483648
        %v1928 = vxor.u32 %v1902, 2147483648
        %v1929 = vxor.u32 %v1905, 2147483648
        %v1930 = vxor.u32 %v1907, 2147483648
        %v1931 = vxor.u32 %v1910, 2147483648
        %v1932 = vxor.u32 %v1912, 2147483648
        %v1933 = vxor.u32 %v1915, 2147483648
        %v1934 = vxor.u32 %v1917, 2147483648
        %v1935 = vmul.f32 %v1919, 1.442695
        %v1936 = vpow.pop %v1935
        %v1937 = vmul.f32 %v1920, 1.442695
        %v1938 = vpow.pop %v1937
        %v1939 = vmul.f32 %v1921, 1.442695
        %v1940 = vpow.pop %v1939
        %v1941 = vmul.f32 %v1922, 1.442695
        %v1942 = vpow.pop %v1941
        %v1943 = vmul.f32 %v1923, 1.442695
        %v1944 = vpow.pop %v1943
        %v1945 = vmul.f32 %v1924, 1.442695
        %v1946 = vpow.pop %v1945
        %v1947 = vmul.f32 %v1925, 1.442695
        %v1948 = vpow.pop %v1947
        %v1949 = vmul.f32 %v1926, 1.442695
        %v1950 = vpow.pop %v1949
        %v1951 = vmul.f32 %v1927, 1.442695
        %v1952 = vpow.pop %v1951
        %v1953 = vmul.f32 %v1928, 1.442695
        %v1954 = vpow.pop %v1953
        %v1955 = vmul.f32 %v1929, 1.442695
        %v1956 = vpow.pop %v1955
        %v1957 = vmul.f32 %v1930, 1.442695
        %v1958 = vpow.pop %v1957
        %v1959 = vmul.f32 %v1931, 1.442695
        %v1960 = vpow.pop %v1959
        %v1961 = vmul.f32 %v1932, 1.442695
        %v1962 = vpow.pop %v1961
        %v1963 = vmul.f32 %v1933, 1.442695
        %v1964 = vpow.pop %v1963
        %v1965 = vmul.f32 %v1934, 1.442695
        %v1966 = vpow.pop %v1965
        %v1967 = vadd.f32 %v1936, 1.0
        %v1968 = vadd.f32 %v1938, 1.0
        %v1969 = vadd.f32 %v1940, 1.0
        %v1970 = vadd.f32 %v1942, 1.0
        %v1971 = vadd.f32 %v1944, 1.0
        %v1972 = vadd.f32 %v1946, 1.0
        %v1973 = vadd.f32 %v1948, 1.0
        %v1974 = vadd.f32 %v1950, 1.0
        %v1975 = vadd.f32 %v1952, 1.0
        %v1976 = vadd.f32 %v1954, 1.0
        %v1977 = vadd.f32 %v1956, 1.0
        %v1978 = vadd.f32 %v1958, 1.0
        %v1979 = vadd.f32 %v1960, 1.0
        %v1980 = vadd.f32 %v1962, 1.0
        %v1981 = vadd.f32 %v1964, 1.0
        %v1982 = vadd.f32 %v1966, 1.0
        %v1983 = vrcp.pop %v1967
        %v1984 = vmul.f32 %v1967, %v1983
        %v1985 = vsub.f32 1.0, %v1984
        %v1986 = vmul.f32 %v1983, %v1985
        %v1987 = vadd.f32 %v1983, %v1986
        %vm1988 = vweird.f32 %v1967
        %vm1989 = vweird.f32 %v1983
        %vm1990 = vmor %vm1988, %vm1989
        %v1991 = vsel %vm1990, %v1983, %v1987
        %v1992 = vand.u32 2147483647, %v1967
        %vm1993 = vcmp.eq.f32.partialorder %v1992, 8.507059e+37
        %v1994 = vand.u32 %v1967, 2147483648
        %v1995 = vor.u32 1.1754944e-38, %v1994
        %v1996 = vsel %vm1993, %v1995, %v1991
        %v1997 = vmul.f32 1.0, %v1996
        %v1998 = vrcp.pop %v1968
        %v1999 = vmul.f32 %v1968, %v1998
        %v2000 = vsub.f32 1.0, %v1999
        %v2001 = vmul.f32 %v1998, %v2000
        %v2002 = vadd.f32 %v1998, %v2001
        %vm2003 = vweird.f32 %v1968
        %vm2004 = vweird.f32 %v1998
        %vm2005 = vmor %vm2003, %vm2004
        %v2006 = vsel %vm2005, %v1998, %v2002
        %v2007 = vand.u32 2147483647, %v1968
        %vm2008 = vcmp.eq.f32.partialorder %v2007, 8.507059e+37
        %v2009 = vand.u32 %v1968, 2147483648
        %v2010 = vor.u32 1.1754944e-38, %v2009
        %v2011 = vsel %vm2008, %v2010, %v2006
        %v2012 = vmul.f32 1.0, %v2011
        %v2013 = vrcp.pop %v1969
        %v2014 = vmul.f32 %v1969, %v2013
        %v2015 = vsub.f32 1.0, %v2014
        %v2016 = vmul.f32 %v2013, %v2015
        %v2017 = vadd.f32 %v2013, %v2016
        %vm2018 = vweird.f32 %v1969
        %vm2019 = vweird.f32 %v2013
        %vm2020 = vmor %vm2018, %vm2019
        %v2021 = vsel %vm2020, %v2013, %v2017
        %v2022 = vand.u32 2147483647, %v1969
        %vm2023 = vcmp.eq.f32.partialorder %v2022, 8.507059e+37
        %v2024 = vand.u32 %v1969, 2147483648
        %v2025 = vor.u32 1.1754944e-38, %v2024
        %v2026 = vsel %vm2023, %v2025, %v2021
        %v2027 = vmul.f32 1.0, %v2026
        %v2028 = vrcp.pop %v1970
        %v2029 = vmul.f32 %v1970, %v2028
        %v2030 = vsub.f32 1.0, %v2029
        %v2031 = vmul.f32 %v2028, %v2030
        %v2032 = vadd.f32 %v2028, %v2031
        %vm2033 = vweird.f32 %v1970
        %vm2034 = vweird.f32 %v2028
        %vm2035 = vmor %vm2033, %vm2034
        %v2036 = vsel %vm2035, %v2028, %v2032
        %v2037 = vand.u32 2147483647, %v1970
        %vm2038 = vcmp.eq.f32.partialorder %v2037, 8.507059e+37
        %v2039 = vand.u32 %v1970, 2147483648
        %v2040 = vor.u32 1.1754944e-38, %v2039
        %v2041 = vsel %vm2038, %v2040, %v2036
        %v2042 = vmul.f32 1.0, %v2041
        %v2043 = vrcp.pop %v1971
        %v2044 = vmul.f32 %v1971, %v2043
        %v2045 = vsub.f32 1.0, %v2044
        %v2046 = vmul.f32 %v2043, %v2045
        %v2047 = vadd.f32 %v2043, %v2046
        %vm2048 = vweird.f32 %v1971
        %vm2049 = vweird.f32 %v2043
        %vm2050 = vmor %vm2048, %vm2049
        %v2051 = vsel %vm2050, %v2043, %v2047
        %v2052 = vand.u32 2147483647, %v1971
        %vm2053 = vcmp.eq.f32.partialorder %v2052, 8.507059e+37
        %v2054 = vand.u32 %v1971, 2147483648
        %v2055 = vor.u32 1.1754944e-38, %v2054
        %v2056 = vsel %vm2053, %v2055, %v2051
        %v2057 = vmul.f32 1.0, %v2056
        %v2058 = vrcp.pop %v1972
        %v2059 = vmul.f32 %v1972, %v2058
        %v2060 = vsub.f32 1.0, %v2059
        %v2061 = vmul.f32 %v2058, %v2060
        %v2062 = vadd.f32 %v2058, %v2061
        %vm2063 = vweird.f32 %v1972
        %vm2064 = vweird.f32 %v2058
        %vm2065 = vmor %vm2063, %vm2064
        %v2066 = vsel %vm2065, %v2058, %v2062
        %v2067 = vand.u32 2147483647, %v1972
        %vm2068 = vcmp.eq.f32.partialorder %v2067, 8.507059e+37
        %v2069 = vand.u32 %v1972, 2147483648
        %v2070 = vor.u32 1.1754944e-38, %v2069
        %v2071 = vsel %vm2068, %v2070, %v2066
        %v2072 = vmul.f32 1.0, %v2071
        %v2073 = vrcp.pop %v1973
        %v2074 = vmul.f32 %v1973, %v2073
        %v2075 = vsub.f32 1.0, %v2074
        %v2076 = vmul.f32 %v2073, %v2075
        %v2077 = vadd.f32 %v2073, %v2076
        %vm2078 = vweird.f32 %v1973
        %vm2079 = vweird.f32 %v2073
        %vm2080 = vmor %vm2078, %vm2079
        %v2081 = vsel %vm2080, %v2073, %v2077
        %v2082 = vand.u32 2147483647, %v1973
        %vm2083 = vcmp.eq.f32.partialorder %v2082, 8.507059e+37
        %v2084 = vand.u32 %v1973, 2147483648
        %v2085 = vor.u32 1.1754944e-38, %v2084
        %v2086 = vsel %vm2083, %v2085, %v2081
        %v2087 = vmul.f32 1.0, %v2086
        %v2088 = vrcp.pop %v1974
        %v2089 = vmul.f32 %v1974, %v2088
        %v2090 = vsub.f32 1.0, %v2089
        %v2091 = vmul.f32 %v2088, %v2090
        %v2092 = vadd.f32 %v2088, %v2091
        %vm2093 = vweird.f32 %v1974
        %vm2094 = vweird.f32 %v2088
        %vm2095 = vmor %vm2093, %vm2094
        %v2096 = vsel %vm2095, %v2088, %v2092
        %v2097 = vand.u32 2147483647, %v1974
        %vm2098 = vcmp.eq.f32.partialorder %v2097, 8.507059e+37
        %v2099 = vand.u32 %v1974, 2147483648
        %v2100 = vor.u32 1.1754944e-38, %v2099
        %v2101 = vsel %vm2098, %v2100, %v2096
        %v2102 = vmul.f32 1.0, %v2101
        %v2103 = vrcp.pop %v1975
        %v2104 = vmul.f32 %v1975, %v2103
        %v2105 = vsub.f32 1.0, %v2104
        %v2106 = vmul.f32 %v2103, %v2105
        %v2107 = vadd.f32 %v2103, %v2106
        %vm2108 = vweird.f32 %v1975
        %vm2109 = vweird.f32 %v2103
        %vm2110 = vmor %vm2108, %vm2109
        %v2111 = vsel %vm2110, %v2103, %v2107
        %v2112 = vand.u32 2147483647, %v1975
        %vm2113 = vcmp.eq.f32.partialorder %v2112, 8.507059e+37
        %v2114 = vand.u32 %v1975, 2147483648
        %v2115 = vor.u32 1.1754944e-38, %v2114
        %v2116 = vsel %vm2113, %v2115, %v2111
        %v2117 = vmul.f32 1.0, %v2116
        %v2118 = vrcp.pop %v1976
        %v2119 = vmul.f32 %v1976, %v2118
        %v2120 = vsub.f32 1.0, %v2119
        %v2121 = vmul.f32 %v2118, %v2120
        %v2122 = vadd.f32 %v2118, %v2121
        %vm2123 = vweird.f32 %v1976
        %vm2124 = vweird.f32 %v2118
        %vm2125 = vmor %vm2123, %vm2124
        %v2126 = vsel %vm2125, %v2118, %v2122
        %v2127 = vand.u32 2147483647, %v1976
        %vm2128 = vcmp.eq.f32.partialorder %v2127, 8.507059e+37
        %v2129 = vand.u32 %v1976, 2147483648
        %v2130 = vor.u32 1.1754944e-38, %v2129
        %v2131 = vsel %vm2128, %v2130, %v2126
        %v2132 = vmul.f32 1.0, %v2131
        %v2133 = vrcp.pop %v1977
        %v2134 = vmul.f32 %v1977, %v2133
        %v2135 = vsub.f32 1.0, %v2134
        %v2136 = vmul.f32 %v2133, %v2135
        %v2137 = vadd.f32 %v2133, %v2136
        %vm2138 = vweird.f32 %v1977
        %vm2139 = vweird.f32 %v2133
        %vm2140 = vmor %vm2138, %vm2139
        %v2141 = vsel %vm2140, %v2133, %v2137
        %v2142 = vand.u32 2147483647, %v1977
        %vm2143 = vcmp.eq.f32.partialorder %v2142, 8.507059e+37
        %v2144 = vand.u32 %v1977, 2147483648
        %v2145 = vor.u32 1.1754944e-38, %v2144
        %v2146 = vsel %vm2143, %v2145, %v2141
        %v2147 = vmul.f32 1.0, %v2146
        %v2148 = vrcp.pop %v1978
        %v2149 = vmul.f32 %v1978, %v2148
        %v2150 = vsub.f32 1.0, %v2149
        %v2151 = vmul.f32 %v2148, %v2150
        %v2152 = vadd.f32 %v2148, %v2151
        %vm2153 = vweird.f32 %v1978
        %vm2154 = vweird.f32 %v2148
        %vm2155 = vmor %vm2153, %vm2154
        %v2156 = vsel %vm2155, %v2148, %v2152
        %v2157 = vand.u32 2147483647, %v1978
        %vm2158 = vcmp.eq.f32.partialorder %v2157, 8.507059e+37
        %v2159 = vand.u32 %v1978, 2147483648
        %v2160 = vor.u32 1.1754944e-38, %v2159
        %v2161 = vsel %vm2158, %v2160, %v2156
        %v2162 = vmul.f32 1.0, %v2161
        %v2163 = vrcp.pop %v1979
        %v2164 = vmul.f32 %v1979, %v2163
        %v2165 = vsub.f32 1.0, %v2164
        %v2166 = vmul.f32 %v2163, %v2165
        %v2167 = vadd.f32 %v2163, %v2166
        %vm2168 = vweird.f32 %v1979
        %vm2169 = vweird.f32 %v2163
        %vm2170 = vmor %vm2168, %vm2169
        %v2171 = vsel %vm2170, %v2163, %v2167
        %v2172 = vand.u32 2147483647, %v1979
        %vm2173 = vcmp.eq.f32.partialorder %v2172, 8.507059e+37
        %v2174 = vand.u32 %v1979, 2147483648
        %v2175 = vor.u32 1.1754944e-38, %v2174
        %v2176 = vsel %vm2173, %v2175, %v2171
        %v2177 = vmul.f32 1.0, %v2176
        %v2178 = vrcp.pop %v1980
        %v2179 = vmul.f32 %v1980, %v2178
        %v2180 = vsub.f32 1.0, %v2179
        %v2181 = vmul.f32 %v2178, %v2180
        %v2182 = vadd.f32 %v2178, %v2181
        %vm2183 = vweird.f32 %v1980
        %vm2184 = vweird.f32 %v2178
        %vm2185 = vmor %vm2183, %vm2184
        %v2186 = vsel %vm2185, %v2178, %v2182
        %v2187 = vand.u32 2147483647, %v1980
        %vm2188 = vcmp.eq.f32.partialorder %v2187, 8.507059e+37
        %v2189 = vand.u32 %v1980, 2147483648
        %v2190 = vor.u32 1.1754944e-38, %v2189
        %v2191 = vsel %vm2188, %v2190, %v2186
        %v2192 = vmul.f32 1.0, %v2191
        %v2193 = vrcp.pop %v1981
        %v2194 = vmul.f32 %v1981, %v2193
        %v2195 = vsub.f32 1.0, %v2194
        %v2196 = vmul.f32 %v2193, %v2195
        %v2197 = vadd.f32 %v2193, %v2196
        %vm2198 = vweird.f32 %v1981
        %vm2199 = vweird.f32 %v2193
        %vm2200 = vmor %vm2198, %vm2199
        %v2201 = vsel %vm2200, %v2193, %v2197
        %v2202 = vand.u32 2147483647, %v1981
        %vm2203 = vcmp.eq.f32.partialorder %v2202, 8.507059e+37
        %v2204 = vand.u32 %v1981, 2147483648
        %v2205 = vor.u32 1.1754944e-38, %v2204
        %v2206 = vsel %vm2203, %v2205, %v2201
        %v2207 = vmul.f32 1.0, %v2206
        %v2208 = vrcp.pop %v1982
        %v2209 = vmul.f32 %v1982, %v2208
        %v2210 = vsub.f32 1.0, %v2209
        %v2211 = vmul.f32 %v2208, %v2210
        %v2212 = vadd.f32 %v2208, %v2211
        %vm2213 = vweird.f32 %v1982
        %vm2214 = vweird.f32 %v2208
        %vm2215 = vmor %vm2213, %vm2214
        %v2216 = vsel %vm2215, %v2208, %v2212
        %v2217 = vand.u32 2147483647, %v1982
        %vm2218 = vcmp.eq.f32.partialorder %v2217, 8.507059e+37
        %v2219 = vand.u32 %v1982, 2147483648
        %v2220 = vor.u32 1.1754944e-38, %v2219
        %v2221 = vsel %vm2218, %v2220, %v2216
        %v2222 = vmul.f32 1.0, %v2221
        %v2223 = vsub.f32 %v1782, %v865
        %v2224 = vsub.f32 %v1784, %v866
        %v2225 = vsub.f32 %v1787, %v867
        %v2226 = vsub.f32 %v1789, %v868
        %v2227 = vsub.f32 %v1792, %v869
        %v2228 = vsub.f32 %v1794, %v870
        %v2229 = vsub.f32 %v1797, %v871
        %v2230 = vsub.f32 %v1799, %v872
        %v2231 = vsub.f32 %v1802, %v873
        %v2232 = vsub.f32 %v1804, %v874
        %v2233 = vsub.f32 %v1807, %v875
        %v2234 = vsub.f32 %v1809, %v876
        %v2235 = vsub.f32 %v1812, %v877
        %v2236 = vsub.f32 %v1814, %v878
        %v2237 = vsub.f32 %v1817, %v879
        %v2238 = vsub.f32 %v1819, %v880
        %v2239 = vmul.f32 %v1997, %v2223
        %v2240 = vmul.f32 %v2012, %v2224
        %v2241 = vmul.f32 %v2027, %v2225
        %v2242 = vmul.f32 %v2042, %v2226
        %v2243 = vmul.f32 %v2057, %v2227
        %v2244 = vmul.f32 %v2072, %v2228
        %v2245 = vmul.f32 %v2087, %v2229
        %v2246 = vmul.f32 %v2102, %v2230
        %v2247 = vmul.f32 %v2117, %v2231
        %v2248 = vmul.f32 %v2132, %v2232
        %v2249 = vmul.f32 %v2147, %v2233
        %v2250 = vmul.f32 %v2162, %v2234
        %v2251 = vmul.f32 %v2177, %v2235
        %v2252 = vmul.f32 %v2192, %v2236
        %v2253 = vmul.f32 %v2207, %v2237
        %v2254 = vmul.f32 %v2222, %v2238
        %v2255 = vadd.f32 %v865, %v2239
        %v2256 = vadd.f32 %v866, %v2240
        %v2257 = vadd.f32 %v867, %v2241
        %v2258 = vadd.f32 %v868, %v2242
        %v2259 = vadd.f32 %v869, %v2243
        %v2260 = vadd.f32 %v870, %v2244
        %v2261 = vadd.f32 %v871, %v2245
        %v2262 = vadd.f32 %v872, %v2246
        %v2263 = vadd.f32 %v873, %v2247
        %v2264 = vadd.f32 %v874, %v2248
        %v2265 = vadd.f32 %v875, %v2249
        %v2266 = vadd.f32 %v876, %v2250
        %v2267 = vadd.f32 %v877, %v2251
        %v2268 = vadd.f32 %v878, %v2252
        %v2269 = vadd.f32 %v879, %v2253
        %v2270 = vadd.f32 %v880, %v2254
        %2271 = vst [vmem:[%s443] sm:$0xff] %v2255
        %2272 = vst [vmem:[%s443 + $0x8] sm:$0xff] %v2256
        %2273 = vst [vmem:[%s443 + $0x10] sm:$0xff] %v2257
        %2274 = vst [vmem:[%s443 + $0x18] sm:$0xff] %v2258
        %2275 = vst [vmem:[%s443 + $0x20] sm:$0xff] %v2259
        %2276 = vst [vmem:[%s443 + $0x28] sm:$0xff] %v2260
        %2277 = vst [vmem:[%s443 + $0x30] sm:$0xff] %v2261
        %2278 = vst [vmem:[%s443 + $0x38] sm:$0xff] %v2262
        %2279 = vst [vmem:[%s443 + $0x40] sm:$0xff] %v2263
        %2280 = vst [vmem:[%s443 + $0x48] sm:$0xff] %v2264
        %2281 = vst [vmem:[%s443 + $0x50] sm:$0xff] %v2265
        %2282 = vst [vmem:[%s443 + $0x58] sm:$0xff] %v2266
        %2283 = vst [vmem:[%s443 + $0x60] sm:$0xff] %v2267
        %2284 = vst [vmem:[%s443 + $0x68] sm:$0xff] %v2268
        %2285 = vst [vmem:[%s443 + $0x70] sm:$0xff] %v2269
        %2286 = vst [vmem:[%s443 + $0x78] sm:$0xff] %v2270
        %s2287 = sand.u32 %s231, 1
        %s2288 = scalar_lea.sflag [#allocation4], %s2287
        %s2289 = sand.u32 %s231, 1
        %s2290 = smul.addr %s2289, 128
        %s2291 = scalar_lea.vmem [#allocation14], %s2290
        // Predicated region
        $region85: #{tpu_custom_call.1} parent=55 // pred_check
          %p2292 = pneg %p241
        $region86: #{tpu_custom_call.1} parent=55 // pred_check_branch
          %2294 = sbr.rel (%p2292) target = $region88
        $region87: #{tpu_custom_call.1} parent=55 // pred_region
          %s2295 = smul.u32 16, %s29
          %2297 = vsyncadd %s2288, 0
          %s2298 = smul.addr %s2295, 8
          %s2299 = scalar_lea.hbm %s9, %s2298
          %s2300 = sshll.u32 %s2291, 4
          %s2301 = int_to_ptr.vmem [resolvable:$true] %s2300
          %s2302 = sshll.u32 %s2299, 4
          %s2303 = int_to_ptr.hbm [resolvable:$true] %s2302
          %2308 = dma.vmem_to_hbm [thread:$0]  %s2301, 2048, %s2303, %s2288, 128, 128, 8
        $region88: #{tpu_custom_call.1} parent=55 // pred_fallthru
          _
      $region56: #{tpu_custom_call.1} parent=5 // pred_fallthru
        _
      %p2309 = scmp.le.s32.totalorder 2, %s24
      // Predicated region
      $region89: #{tpu_custom_call.1} parent=5 // pred_check
        %p2310 = pneg %p2309
      $region90: #{tpu_custom_call.1} parent=5 // pred_check_branch
        %2312 = sbr.rel (%p2310) target = $region92
      $region91: #{tpu_custom_call.1} parent=5 // pred_region
        %s2313 = ssub.s32 %s24, 2
        // Predicated region
        $region93: #{tpu_custom_call.1} parent=91 // pred_check
          %p2314 = pneg %p247
        $region94: #{tpu_custom_call.1} parent=91 // pred_check_branch
          %2316 = sbr.rel (%p2314) target = $region96
        $region95: #{tpu_custom_call.1} parent=91 // pred_region
          %s2317 = sand.u32 %s232, 1
          %s2318 = scalar_lea.sflag [#allocation4], %s2317
          %s2319 = sand.u32 %s232, 1
          %s2320 = smul.addr %s2319, 128
          %s2321 = scalar_lea.vmem [#allocation14], %s2320
          %2323 = dma.done %s2318, 2048
        $region96: #{tpu_custom_call.1} parent=91 // pred_fallthru
          _
      $region92: #{tpu_custom_call.1} parent=5 // pred_fallthru
        _
    $region6: #{tpu_custom_call.1} parent=1 // loop_footer
      %s28 = sadd.s32 1, %s24
    $region7: #{tpu_custom_call.1} parent=1 // loop_footer_branch
      %23 = sbr.rel target = $region3
    $region8: #{tpu_custom_call.1} parent=1 // loop_exit
      _
    %2324 = vsyncpa [#allocation3], 1
    %s2325 = scalar_lea.sflag [#allocation3], 1
    %2326 = vsyncpa %s2325, 1
    %2327 = vsyncpa [#allocation6], 1
    %2328 = vsyncpa [#allocation9], 1
    %2329 = vsyncpa [#allocation12], 1
    %2330 = vsyncpa [#allocation4], 1
    %s2331 = scalar_lea.sflag [#allocation4], 1
    %2332 = vsyncpa %s2331, 1

</llo_original>
